<compile_context>
chip_gen: v5e
topology: v5e:2x2
jax: 0.10.0
libtpu: 0.0.40
codegen_flags: <defaults>
</compile_context>

<pallas_src>
import math

import jax
import jax.numpy as jnp
from jax.experimental import pallas as pl
from jax.experimental.pallas import tpu as pltpu


# ----------------------------------------------------------------------------
# Small config (consistent with GPT2Model + heads in the PyTorch module)
# ----------------------------------------------------------------------------
VOCAB = 64
N_POS = 16
N_EMBD = 32
N_HEAD = 2
N_LAYER = 2
HEAD_DIM = N_EMBD // N_HEAD
N_CATS = 4          # ['domain', 'intent', 'slot', 'db']
N_DOMAINS = 6
N_INTENTS = 5
N_SLOTS = 7
DB_DIM = 24
LN_EPS = 1e-5

HEAD_TOTAL = N_CATS + N_DOMAINS + N_INTENTS + N_SLOTS   # 22
HEAD_PAD = 128                                           # lane-dense logit slab
NEG_BIG = -1e9                                           # bf16-safe mask value


def _full_spec(shape):
    """BlockSpec covering the full array (runs with grid=(1,))."""
    n = len(shape)
    return pl.BlockSpec(shape, lambda *_: (0,) * n)


def _gelu_new(x):
    # GPT-2 "gelu_new" (tanh approximation)
    return 0.5 * x * (1.0 + jnp.tanh(
        math.sqrt(2.0 / math.pi) * (x + 0.044715 * x * x * x)))


# ----------------------------------------------------------------------------
# Fused forward kernel: db_emb + N_LAYER transformer blocks + ln_f + heads
# ----------------------------------------------------------------------------
def _fused_kernel(x_ref, db_ref, bias_ref,
                  db_w_ref, db_b_ref,
                  ln1_g_ref, ln1_b_ref, attn_w_ref, attn_b_ref,
                  proj_w_ref, proj_b_ref,
                  ln2_g_ref, ln2_b_ref, fc_w_ref, fc_b_ref,
                  mlp_w_ref, mlp_b_ref,
                  lnf_g_ref, lnf_b_ref,
                  head_w_ref, head_b_ref,
                  hid_ref, logits_ref):
    f32 = jnp.float32

    def layer_norm(x, g, b):
        mu = jnp.mean(x, axis=-1, keepdims=True)
        var = jnp.mean(jnp.square(x - mu), axis=-1, keepdims=True)
        return (x - mu) * jax.lax.rsqrt(var + LN_EPS) * g + b

    # inputs_embeds (+ cat/pos/token-type already summed outside) + db_emb(db)
    h = (x_ref[...]
         + jnp.dot(db_ref[...], db_w_ref[...], preferred_element_type=f32)
         + db_b_ref[...])

    bias = bias_ref[...]                       # (M, M) additive causal+batch mask
    scale = 1.0 / math.sqrt(HEAD_DIM)

    for l in range(N_LAYER):
        # ---- attention (LN1 fused) ----
        x_ln = layer_norm(h, ln1_g_ref[l], ln1_b_ref[l])
        qkv = (jnp.dot(x_ln, attn_w_ref[l], preferred_element_type=f32)
               + attn_b_ref[l])                                   # (M, 3D)
        proj_w = proj_w_ref[l]                                    # (D, D)

        attn_upd = jnp.zeros_like(h)
        for hd in range(N_HEAD):
            lo = hd * HEAD_DIM
            q = qkv[:, lo:lo + HEAD_DIM]                          # (M, Dh)
            k = qkv[:, N_EMBD + lo:N_EMBD + lo + HEAD_DIM]
            v = qkv[:, 2 * N_EMBD + lo:2 * N_EMBD + lo + HEAD_DIM]

            s = jnp.dot(q, k.T, preferred_element_type=f32) * scale + bias
            s = s - jnp.max(s, axis=-1, keepdims=True)
            p = jnp.exp(s)
            p = p * pl.reciprocal(jnp.sum(p, axis=-1, keepdims=True),
                                  approx=True)
            o_h = jnp.dot(p, v, preferred_element_type=f32)       # (M, Dh)
            # accumulate the per-head slice of the output projection
            attn_upd = attn_upd + jnp.dot(o_h, proj_w[lo:lo + HEAD_DIM, :],
                                          preferred_element_type=f32)
        h = h + attn_upd + proj_b_ref[l]

        # ---- MLP (LN2 fused) ----
        x_ln2 = layer_norm(h, ln2_g_ref[l], ln2_b_ref[l])
        mlp = _gelu_new(jnp.dot(x_ln2, fc_w_ref[l], preferred_element_type=f32)
                        + fc_b_ref[l])
        h = h + jnp.dot(mlp, mlp_w_ref[l], preferred_element_type=f32) \
              + mlp_b_ref[l]

    # ---- final LN + packed heads (lane-dense store) ----
    h = layer_norm(h, lnf_g_ref[...], lnf_b_ref[...])
    hid_ref[...] = h
    logits_ref[...] = (jnp.dot(h, head_w_ref[...], preferred_element_type=f32)
                       + head_b_ref[...])


def _fused_forward_call(x_emb, db, attn_bias, pp):
    M = x_emb.shape[0]
    ins = [x_emb, db, attn_bias,
           pp["db_w"], pp["db_b"],
           pp["ln1_g"], pp["ln1_b"], pp["attn_w"], pp["attn_b"],
           pp["proj_w"], pp["proj_b"],
           pp["ln2_g"], pp["ln2_b"], pp["fc_w"], pp["fc_b"],
           pp["mlp_w"], pp["mlp_b"],
           pp["lnf_g"], pp["lnf_b"],
           pp["head_w"], pp["head_b"]]
    in_specs = [_full_spec(a.shape) for a in ins]
    out_shape = (jax.ShapeDtypeStruct((M, N_EMBD), jnp.float32),
                 jax.ShapeDtypeStruct((M, HEAD_PAD), jnp.float32))
    out_specs = (_full_spec((M, N_EMBD)), _full_spec((M, HEAD_PAD)))
    return pl.pallas_call(
        _fused_kernel,
        grid=(1,),
        out_shape=out_shape,
        in_specs=in_specs,
        out_specs=out_specs,
        compiler_params=pltpu.CompilerParams(
            dimension_semantics=("arbitrary",),
            # budget against v7x's 64 MiB VMEM; this model uses < 1 MiB
            vmem_limit_bytes=32 * 1024 * 1024),
    )(*ins)


# ----------------------------------------------------------------------------
# Parameters (deterministic synthetic init, mirroring the PyTorch module)
# ----------------------------------------------------------------------------
def init_params(key):
    keys = iter(jax.random.split(key, 128))

    def nrm(shape, std=0.02):
        return jax.random.normal(next(keys), shape, jnp.float32) * std

    params = {
        "wte": nrm((VOCAB, N_EMBD)),
        "wpe": nrm((N_POS, N_EMBD)),
        "cat_emb": nrm((N_CATS, N_EMBD)),
        "db_w": nrm((DB_DIM, N_EMBD)),
        "db_b": jnp.zeros((N_EMBD,), jnp.float32),
        "lnf_g": jnp.ones((N_EMBD,), jnp.float32),
        "lnf_b": jnp.zeros((N_EMBD,), jnp.float32),
        "cat_head_w": nrm((N_EMBD, N_CATS)),
        "cat_head_b": jnp.zeros((N_CATS,), jnp.float32),
        "domain_head_w": nrm((N_EMBD, N_DOMAINS)),
        "domain_head_b": jnp.zeros((N_DOMAINS,), jnp.float32),
        "intent_head_w": nrm((N_EMBD, N_INTENTS)),
        "intent_head_b": jnp.zeros((N_SLOTS - 2,), jnp.float32),  # placeholder, fixed below
        "slot_head_w": nrm((N_EMBD, N_SLOTS)),
        "slot_head_b": jnp.zeros((N_SLOTS,), jnp.float32),
        "blocks": [],
    }
    # correct intent bias shape
    params["intent_head_b"] = jnp.zeros((N_INTENTS,), jnp.float32)
    for _ in range(N_LAYER):
        params["blocks"].append({
            "ln1_g": jnp.ones((N_EMBD,), jnp.float32),
            "ln1_b": jnp.zeros((N_EMBD,), jnp.float32),
            "attn_w": nrm((N_EMBD, 3 * N_EMBD)),
            "attn_b": jnp.zeros((3 * N_EMBD,), jnp.float32),
            "proj_w": nrm((N_EMBD, N_EMBD)),
            "proj_b": jnp.zeros((N_EMBD,), jnp.float32),
            "ln2_g": jnp.ones((N_EMBD,), jnp.float32),
            "ln2_b": jnp.zeros((N_EMBD,), jnp.float32),
            "fc_w": nrm((N_EMBD, 4 * N_EMBD)),
            "fc_b": jnp.zeros((4 * N_EMBD,), jnp.float32),
            "mlp_proj_w": nrm((4 * N_EMBD, N_EMBD)),
            "mlp_proj_b": jnp.zeros((N_EMBD,), jnp.float32),
        })
    return params


def prepare_params(params):
    """One-time packing: stack per-layer weights, reshape biases to (1, N),
    and concatenate + lane-pad the four classification heads."""
    L = N_LAYER
    f32 = jnp.float32

    def stack(name):
        return jnp.stack([blk[name].astype(f32) for blk in params["blocks"]], 0)

    head_w = jnp.concatenate(
        [params["cat_head_w"], params["domain_head_w"],
         params["intent_head_w"], params["slot_head_w"]], axis=1)       # (D, 22)
    head_b = jnp.concatenate(
        [params["cat_head_b"], params["domain_head_b"],
         params["intent_head_b"], params["slot_head_b"]], axis=0)       # (22,)
    head_w = jnp.pad(head_w, ((0, 0), (0, HEAD_PAD - HEAD_TOTAL))).astype(f32)
    head_b = jnp.pad(head_b, (0, HEAD_PAD - HEAD_TOTAL)).reshape(1, HEAD_PAD).astype(f32)

    return {
        "wte": params["wte"].astype(f32),
        "wpe": params["wpe"].astype(f32),
        "cat_emb": params["cat_emb"].astype(f32),
        "db_w": params["db_w"].astype(f32),
        "db_b": params["db_b"].reshape(1, N_EMBD).astype(f32),
        "ln1_g": stack("ln1_g").reshape(L, 1, N_EMBD),
        "ln1_b": stack("ln1_b").reshape(L, 1, N_EMBD),
        "attn_w": stack("attn_w"),
        "attn_b": stack("attn_b").reshape(L, 1, 3 * N_EMBD),
        "proj_w": stack("proj_w"),
        "proj_b": stack("proj_b").reshape(L, 1, N_EMBD),
        "ln2_g": stack("ln2_g").reshape(L, 1, N_EMBD),
        "ln2_b": stack("ln2_b").reshape(L, 1, N_EMBD),
        "fc_w": stack("fc_w"),
        "fc_b": stack("fc_b").reshape(L, 1, 4 * N_EMBD),
        "mlp_w": stack("mlp_proj_w"),
        "mlp_b": stack("mlp_proj_b").reshape(L, 1, N_EMBD),
        "lnf_g": params["lnf_g"].reshape(1, N_EMBD).astype(f32),
        "lnf_b": params["lnf_b"].reshape(1, N_EMBD).astype(f32),
        "head_w": head_w,
        "head_b": head_b,
    }


# ----------------------------------------------------------------------------
# Forward pass (== GPT2MultiHead.forward with add_cat_emb=add_db_emb=True)
# ----------------------------------------------------------------------------
def gpt2_multihead_forward(pp, input_ids, cat_ids, db_ids, token_type_ids):
    B, S = input_ids.shape
    M = B * S

    # --- input embeddings (gathers = plain-JAX glue) ---
    h = pp["wte"][input_ids]                                # (B, S, D)
    cat_clean = jnp.where(cat_ids == -100, 0, cat_ids)      # cat_ids[cat_ids==-100]=0
    h = h + pp["cat_emb"][cat_clean]                        # + cat_emb(cat_ids)
    h = h + pp["wpe"][jnp.arange(S)][None, :, :]            # position embeds
    h = h + pp["wte"][token_type_ids]                       # token-type embeds (GPT2 reuses wte)
    x_emb = h.reshape(M, N_EMBD).astype(jnp.float32)
    db = db_ids.reshape(M, DB_DIM).astype(jnp.float32)

    # precomputed additive attention bias: same-batch AND causal
    idx = jnp.arange(M)
    bi = idx // S
    pi = idx % S
    allowed = (bi[:, None] == bi[None, :]) & (pi[None, :] <= pi[:, None])
    attn_bias = jnp.where(allowed, 0.0, NEG_BIG).astype(jnp.float32)

    hid, logits = _fused_forward_call(x_emb, db, attn_bias, pp)

    hidden_states = hid.reshape(B, S, N_EMBD)
    o = 0
    cat_logits = logits[:, o:o + N_CATS].reshape(B, S, N_CATS); o += N_CATS
    domain_logits = logits[:, o:o + N_DOMAINS].reshape(B, S, N_DOMAINS); o += N_DOMAINS
    intent_logits = logits[:, o:o + N_INTENTS].reshape(B, S, N_INTENTS); o += N_INTENTS
    slot_logits = logits[:, o:o + N_SLOTS].reshape(B, S, N_SLOTS)

    # TODO(synk): generate_one_step / Categorical sampling / top-k-top-p is
    # host-side control flow around this forward pass, intentionally not a kernel.
    return {
        "cat_logits": cat_logits,
        "domain_logits": domain_logits,
        "intent_logits": intent_logits,
        "slot_logits": slot_logits,
        "hidden_states": hidden_states,
    }


# ----------------------------------------------------------------------------
if __name__ == "__main__":
    key = jax.random.PRNGKey(0)
    k_param, k_ids, k_cat, k_db, k_tt = jax.random.split(key, 5)

    params = init_params(k_param)
    prepared = prepare_params(params)

    B, S = 2, 8
    input_ids = jax.random.randint(k_ids, (B, S), 0, VOCAB, dtype=jnp.int32)
    cat_ids = jax.random.randint(k_cat, (B, S), 0, N_CATS, dtype=jnp.int32)
    cat_ids = cat_ids.at[:, 0].set(-100)            # exercise the -100 -> 0 path
    db_ids = jax.random.normal(k_db, (B, S, DB_DIM), jnp.float32)
    token_type_ids = jax.random.randint(k_tt, (B, S), 0, 2, dtype=jnp.int32)

    forward = jax.jit(gpt2_multihead_forward)
    out = forward(prepared, input_ids, cat_ids, db_ids, token_type_ids)
    jax.block_until_ready(out)

    assert out["cat_logits"].shape == (B, S, N_CATS)
    assert out["domain_logits"].shape == (B, S, N_DOMAINS)
    assert out["intent_logits"].shape == (B, S, N_INTENTS)
    assert out["slot_logits"].shape == (B, S, N_SLOTS)
    assert out["hidden_states"].shape == (B, S, N_EMBD)
    assert bool(jnp.all(jnp.isfinite(out["hidden_states"])))
    assert bool(jnp.all(jnp.isfinite(out["cat_logits"])))

    print("KERNEL_OK")
</pallas_src>

<mosaic_0001>
module attributes {stable_mosaic.version = 11 : i64} {
  func.func @_fused_kernel(%arg0: i32, %arg1: memref<16x32xf32, #tpu.memory_space<vmem>>, %arg2: memref<16x24xf32, #tpu.memory_space<vmem>>, %arg3: memref<16x16xf32, #tpu.memory_space<vmem>>, %arg4: memref<24x32xf32, #tpu.memory_space<vmem>>, %arg5: memref<1x32xf32, #tpu.memory_space<vmem>>, %arg6: memref<2x1x32xf32, #tpu.memory_space<vmem>>, %arg7: memref<2x1x32xf32, #tpu.memory_space<vmem>>, %arg8: memref<2x32x96xf32, #tpu.memory_space<vmem>>, %arg9: memref<2x1x96xf32, #tpu.memory_space<vmem>>, %arg10: memref<2x32x32xf32, #tpu.memory_space<vmem>>, %arg11: memref<2x1x32xf32, #tpu.memory_space<vmem>>, %arg12: memref<2x1x32xf32, #tpu.memory_space<vmem>>, %arg13: memref<2x1x32xf32, #tpu.memory_space<vmem>>, %arg14: memref<2x32x128xf32, #tpu.memory_space<vmem>>, %arg15: memref<2x1x128xf32, #tpu.memory_space<vmem>>, %arg16: memref<2x128x32xf32, #tpu.memory_space<vmem>>, %arg17: memref<2x1x32xf32, #tpu.memory_space<vmem>>, %arg18: memref<1x32xf32, #tpu.memory_space<vmem>>, %arg19: memref<1x32xf32, #tpu.memory_space<vmem>>, %arg20: memref<32x128xf32, #tpu.memory_space<vmem>>, %arg21: memref<1x128xf32, #tpu.memory_space<vmem>>, %arg22: memref<16x32xf32, #tpu.memory_space<vmem>>, %arg23: memref<16x128xf32, #tpu.memory_space<vmem>>) attributes {dimension_semantics = [#tpu.dimension_semantics<arbitrary>], iteration_bounds = array<i64: 1>, scalar_prefetch = 0 : i64, scratch_operands = 0 : i64, tpu.core_type = #tpu.core_type<tc>, window_params = [{pipeline_mode = #tpu.pipeline_mode<synchronous>, transform_indices = @transform_0, window_bounds = array<i64: 16, 32>}, {pipeline_mode = #tpu.pipeline_mode<synchronous>, transform_indices = @transform_1, window_bounds = array<i64: 16, 24>}, {pipeline_mode = #tpu.pipeline_mode<synchronous>, transform_indices = @transform_2, window_bounds = array<i64: 16, 16>}, {pipeline_mode = #tpu.pipeline_mode<synchronous>, transform_indices = @transform_3, window_bounds = array<i64: 24, 32>}, {pipeline_mode = #tpu.pipeline_mode<synchronous>, transform_indices = @transform_4, window_bounds = array<i64: 1, 32>}, {pipeline_mode = #tpu.pipeline_mode<synchronous>, transform_indices = @transform_5, window_bounds = array<i64: 2, 1, 32>}, {pipeline_mode = #tpu.pipeline_mode<synchronous>, transform_indices = @transform_6, window_bounds = array<i64: 2, 1, 32>}, {pipeline_mode = #tpu.pipeline_mode<synchronous>, transform_indices = @transform_7, window_bounds = array<i64: 2, 32, 96>}, {pipeline_mode = #tpu.pipeline_mode<synchronous>, transform_indices = @transform_8, window_bounds = array<i64: 2, 1, 96>}, {pipeline_mode = #tpu.pipeline_mode<synchronous>, transform_indices = @transform_9, window_bounds = array<i64: 2, 32, 32>}, {pipeline_mode = #tpu.pipeline_mode<synchronous>, transform_indices = @transform_10, window_bounds = array<i64: 2, 1, 32>}, {pipeline_mode = #tpu.pipeline_mode<synchronous>, transform_indices = @transform_11, window_bounds = array<i64: 2, 1, 32>}, {pipeline_mode = #tpu.pipeline_mode<synchronous>, transform_indices = @transform_12, window_bounds = array<i64: 2, 1, 32>}, {pipeline_mode = #tpu.pipeline_mode<synchronous>, transform_indices = @transform_13, window_bounds = array<i64: 2, 32, 128>}, {pipeline_mode = #tpu.pipeline_mode<synchronous>, transform_indices = @transform_14, window_bounds = array<i64: 2, 1, 128>}, {pipeline_mode = #tpu.pipeline_mode<synchronous>, transform_indices = @transform_15, window_bounds = array<i64: 2, 128, 32>}, {pipeline_mode = #tpu.pipeline_mode<synchronous>, transform_indices = @transform_16, window_bounds = array<i64: 2, 1, 32>}, {pipeline_mode = #tpu.pipeline_mode<synchronous>, transform_indices = @transform_17, window_bounds = array<i64: 1, 32>}, {pipeline_mode = #tpu.pipeline_mode<synchronous>, transform_indices = @transform_18, window_bounds = array<i64: 1, 32>}, {pipeline_mode = #tpu.pipeline_mode<synchronous>, transform_indices = @transform_19, window_bounds = array<i64: 32, 128>}, {pipeline_mode = #tpu.pipeline_mode<synchronous>, transform_indices = @transform_20, window_bounds = array<i64: 1, 128>}, {pipeline_mode = #tpu.pipeline_mode<synchronous>, transform_indices = @transform_21, window_bounds = array<i64: 16, 32>}, {pipeline_mode = #tpu.pipeline_mode<synchronous>, transform_indices = @transform_22, window_bounds = array<i64: 16, 128>}]} {
    %c0 = arith.constant 0 : index
    %c0_0 = arith.constant 0 : index
    %0 = vector.load %arg1[%c0, %c0_0] : memref<16x32xf32, #tpu.memory_space<vmem>>, vector<16x32xf32>
    %c0_1 = arith.constant 0 : index
    %c0_2 = arith.constant 0 : index
    %1 = vector.load %arg2[%c0_1, %c0_2] : memref<16x24xf32, #tpu.memory_space<vmem>>, vector<16x24xf32>
    %c0_3 = arith.constant 0 : index
    %c0_4 = arith.constant 0 : index
    %2 = vector.load %arg4[%c0_3, %c0_4] : memref<24x32xf32, #tpu.memory_space<vmem>>, vector<24x32xf32>
    %cst = arith.constant dense<0.000000e+00> : vector<16x32xf32>
    %3 = tpu.matmul %1, %2, %cst {dimension_numbers = #tpu.dot_dimension_numbers<[1], [0], [0], [1], [0, 0, 1, 1], [], []>} : vector<16x24xf32>, vector<24x32xf32>, vector<16x32xf32> -> vector<16x32xf32>
    %4 = arith.addf %0, %3 : vector<16x32xf32>
    %c0_5 = arith.constant 0 : index
    %c0_6 = arith.constant 0 : index
    %5 = vector.load %arg5[%c0_5, %c0_6] : memref<1x32xf32, #tpu.memory_space<vmem>>, vector<1x32xf32>
    %6 = vector.broadcast %5 : vector<1x32xf32> to vector<16x32xf32>
    %7 = arith.addf %4, %6 : vector<16x32xf32>
    %c0_7 = arith.constant 0 : index
    %c0_8 = arith.constant 0 : index
    %8 = vector.load %arg3[%c0_7, %c0_8] : memref<16x16xf32, #tpu.memory_space<vmem>>, vector<16x16xf32>
    %c0_9 = arith.constant 0 : index
    %c0_10 = arith.constant 0 : index
    %c0_11 = arith.constant 0 : index
    %9 = vector.load %arg6[%c0_9, %c0_10, %c0_11] : memref<2x1x32xf32, #tpu.memory_space<vmem>>, vector<1x1x32xf32>
    %10 = vector.shape_cast %9 : vector<1x1x32xf32> to vector<1x32xf32>
    %c0_12 = arith.constant 0 : index
    %c0_13 = arith.constant 0 : index
    %c0_14 = arith.constant 0 : index
    %11 = vector.load %arg7[%c0_12, %c0_13, %c0_14] : memref<2x1x32xf32, #tpu.memory_space<vmem>>, vector<1x1x32xf32>
    %12 = vector.shape_cast %11 : vector<1x1x32xf32> to vector<1x32xf32>
    %cst_15 = arith.constant dense<0.000000e+00> : vector<16xf32>
    %13 = vector.multi_reduction <add>, %7, %cst_15 [1] : vector<16x32xf32> to vector<16xf32>
    %14 = vector.shape_cast %13 : vector<16xf32> to vector<16x1xf32>
    %cst_16 = arith.constant 3.200000e+01 : f32
    %15 = vector.broadcast %cst_16 : f32 to vector<16x1xf32>
    %16 = arith.divf %14, %15 : vector<16x1xf32>
    %17 = vector.broadcast %16 : vector<16x1xf32> to vector<16x32xf32>
    %18 = arith.subf %7, %17 : vector<16x32xf32>
    %19 = arith.mulf %18, %18 : vector<16x32xf32>
    %cst_17 = arith.constant dense<0.000000e+00> : vector<16xf32>
    %20 = vector.multi_reduction <add>, %19, %cst_17 [1] : vector<16x32xf32> to vector<16xf32>
    %21 = vector.shape_cast %20 : vector<16xf32> to vector<16x1xf32>
    %cst_18 = arith.constant 3.200000e+01 : f32
    %22 = vector.broadcast %cst_18 : f32 to vector<16x1xf32>
    %23 = arith.divf %21, %22 : vector<16x1xf32>
    %24 = vector.broadcast %16 : vector<16x1xf32> to vector<16x32xf32>
    %25 = arith.subf %7, %24 : vector<16x32xf32>
    %cst_19 = arith.constant 9.99999974E-6 : f32
    %26 = vector.broadcast %cst_19 : f32 to vector<16x1xf32>
    %27 = arith.addf %23, %26 : vector<16x1xf32>
    %28 = math.rsqrt %27 : vector<16x1xf32>
    %29 = vector.broadcast %28 : vector<16x1xf32> to vector<16x32xf32>
    %30 = arith.mulf %25, %29 : vector<16x32xf32>
    %31 = vector.broadcast %10 : vector<1x32xf32> to vector<16x32xf32>
    %32 = arith.mulf %30, %31 : vector<16x32xf32>
    %33 = vector.broadcast %12 : vector<1x32xf32> to vector<16x32xf32>
    %34 = arith.addf %32, %33 : vector<16x32xf32>
    %c0_20 = arith.constant 0 : index
    %c0_21 = arith.constant 0 : index
    %c0_22 = arith.constant 0 : index
    %35 = vector.load %arg8[%c0_20, %c0_21, %c0_22] : memref<2x32x96xf32, #tpu.memory_space<vmem>>, vector<1x32x96xf32>
    %36 = vector.shape_cast %35 : vector<1x32x96xf32> to vector<32x96xf32>
    %cst_23 = arith.constant dense<0.000000e+00> : vector<16x96xf32>
    %37 = tpu.matmul %34, %36, %cst_23 {dimension_numbers = #tpu.dot_dimension_numbers<[1], [0], [0], [1], [0, 0, 1, 1], [], []>} : vector<16x32xf32>, vector<32x96xf32>, vector<16x96xf32> -> vector<16x96xf32>
    %c0_24 = arith.constant 0 : index
    %c0_25 = arith.constant 0 : index
    %c0_26 = arith.constant 0 : index
    %38 = vector.load %arg9[%c0_24, %c0_25, %c0_26] : memref<2x1x96xf32, #tpu.memory_space<vmem>>, vector<1x1x96xf32>
    %39 = vector.shape_cast %38 : vector<1x1x96xf32> to vector<1x96xf32>
    %40 = vector.broadcast %39 : vector<1x96xf32> to vector<16x96xf32>
    %41 = arith.addf %37, %40 : vector<16x96xf32>
    %c0_27 = arith.constant 0 : index
    %c0_28 = arith.constant 0 : index
    %c0_29 = arith.constant 0 : index
    %42 = vector.load %arg10[%c0_27, %c0_28, %c0_29] : memref<2x32x32xf32, #tpu.memory_space<vmem>>, vector<1x32x32xf32>
    %43 = vector.shape_cast %42 : vector<1x32x32xf32> to vector<32x32xf32>
    %cst_30 = arith.constant 0.000000e+00 : f32
    %44 = vector.broadcast %cst_30 : f32 to vector<16x32xf32>
    %45 = vector.extract_strided_slice %41 {offsets = [0, 0], sizes = [16, 16], strides = [1, 1]} : vector<16x96xf32> to vector<16x16xf32>
    %46 = vector.extract_strided_slice %41 {offsets = [0, 32], sizes = [16, 16], strides = [1, 1]} : vector<16x96xf32> to vector<16x16xf32>
    %47 = vector.extract_strided_slice %41 {offsets = [0, 64], sizes = [16, 16], strides = [1, 1]} : vector<16x96xf32> to vector<16x16xf32>
    %48 = tpu.transpose %46, [1, 0] : vector<16x16xf32> -> vector<16x16xf32>
    %cst_31 = arith.constant dense<0.000000e+00> : vector<16x16xf32>
    %49 = tpu.matmul %45, %48, %cst_31 {dimension_numbers = #tpu.dot_dimension_numbers<[1], [0], [0], [1], [0, 0, 1, 1], [], []>} : vector<16x16xf32>, vector<16x16xf32>, vector<16x16xf32> -> vector<16x16xf32>
    %cst_32 = arith.constant 2.500000e-01 : f32
    %50 = vector.broadcast %cst_32 : f32 to vector<16x16xf32>
    %51 = arith.mulf %49, %50 : vector<16x16xf32>
    %52 = arith.addf %51, %8 : vector<16x16xf32>
    %cst_33 = arith.constant dense<0xFF800000> : vector<16xf32>
    %53 = vector.multi_reduction <maximumf>, %52, %cst_33 [1] : vector<16x16xf32> to vector<16xf32>
    %54 = vector.shape_cast %53 : vector<16xf32> to vector<16x1xf32>
    %55 = vector.broadcast %54 : vector<16x1xf32> to vector<16x16xf32>
    %56 = arith.subf %52, %55 : vector<16x16xf32>
    %57 = math.exp %56 : vector<16x16xf32>
    %cst_34 = arith.constant dense<0.000000e+00> : vector<16xf32>
    %58 = vector.multi_reduction <add>, %57, %cst_34 [1] : vector<16x16xf32> to vector<16xf32>
    %59 = vector.shape_cast %58 : vector<16xf32> to vector<16x1xf32>
    %60 = tpu.reciprocal %59 {approx = true} : vector<16x1xf32> -> vector<16x1xf32>
    %61 = vector.broadcast %60 : vector<16x1xf32> to vector<16x16xf32>
    %62 = arith.mulf %57, %61 : vector<16x16xf32>
    %cst_35 = arith.constant dense<0.000000e+00> : vector<16x16xf32>
    %63 = tpu.matmul %62, %47, %cst_35 {dimension_numbers = #tpu.dot_dimension_numbers<[1], [0], [0], [1], [0, 0, 1, 1], [], []>} : vector<16x16xf32>, vector<16x16xf32>, vector<16x16xf32> -> vector<16x16xf32>
    %64 = vector.extract_strided_slice %43 {offsets = [0, 0], sizes = [16, 32], strides = [1, 1]} : vector<32x32xf32> to vector<16x32xf32>
    %cst_36 = arith.constant dense<0.000000e+00> : vector<16x32xf32>
    %65 = tpu.matmul %63, %64, %cst_36 {dimension_numbers = #tpu.dot_dimension_numbers<[1], [0], [0], [1], [0, 0, 1, 1], [], []>} : vector<16x16xf32>, vector<16x32xf32>, vector<16x32xf32> -> vector<16x32xf32>
    %66 = arith.addf %44, %65 : vector<16x32xf32>
    %67 = vector.extract_strided_slice %41 {offsets = [0, 16], sizes = [16, 16], strides = [1, 1]} : vector<16x96xf32> to vector<16x16xf32>
    %68 = vector.extract_strided_slice %41 {offsets = [0, 48], sizes = [16, 16], strides = [1, 1]} : vector<16x96xf32> to vector<16x16xf32>
    %69 = vector.extract_strided_slice %41 {offsets = [0, 80], sizes = [16, 16], strides = [1, 1]} : vector<16x96xf32> to vector<16x16xf32>
    %70 = tpu.transpose %68, [1, 0] : vector<16x16xf32> -> vector<16x16xf32>
    %cst_37 = arith.constant dense<0.000000e+00> : vector<16x16xf32>
    %71 = tpu.matmul %67, %70, %cst_37 {dimension_numbers = #tpu.dot_dimension_numbers<[1], [0], [0], [1], [0, 0, 1, 1], [], []>} : vector<16x16xf32>, vector<16x16xf32>, vector<16x16xf32> -> vector<16x16xf32>
    %cst_38 = arith.constant 2.500000e-01 : f32
    %72 = vector.broadcast %cst_38 : f32 to vector<16x16xf32>
    %73 = arith.mulf %71, %72 : vector<16x16xf32>
    %74 = arith.addf %73, %8 : vector<16x16xf32>
    %cst_39 = arith.constant dense<0xFF800000> : vector<16xf32>
    %75 = vector.multi_reduction <maximumf>, %74, %cst_39 [1] : vector<16x16xf32> to vector<16xf32>
    %76 = vector.shape_cast %75 : vector<16xf32> to vector<16x1xf32>
    %77 = vector.broadcast %76 : vector<16x1xf32> to vector<16x16xf32>
    %78 = arith.subf %74, %77 : vector<16x16xf32>
    %79 = math.exp %78 : vector<16x16xf32>
    %cst_40 = arith.constant dense<0.000000e+00> : vector<16xf32>
    %80 = vector.multi_reduction <add>, %79, %cst_40 [1] : vector<16x16xf32> to vector<16xf32>
    %81 = vector.shape_cast %80 : vector<16xf32> to vector<16x1xf32>
    %82 = tpu.reciprocal %81 {approx = true} : vector<16x1xf32> -> vector<16x1xf32>
    %83 = vector.broadcast %82 : vector<16x1xf32> to vector<16x16xf32>
    %84 = arith.mulf %79, %83 : vector<16x16xf32>
    %cst_41 = arith.constant dense<0.000000e+00> : vector<16x16xf32>
    %85 = tpu.matmul %84, %69, %cst_41 {dimension_numbers = #tpu.dot_dimension_numbers<[1], [0], [0], [1], [0, 0, 1, 1], [], []>} : vector<16x16xf32>, vector<16x16xf32>, vector<16x16xf32> -> vector<16x16xf32>
    %86 = vector.extract_strided_slice %43 {offsets = [16, 0], sizes = [16, 32], strides = [1, 1]} : vector<32x32xf32> to vector<16x32xf32>
    %cst_42 = arith.constant dense<0.000000e+00> : vector<16x32xf32>
    %87 = tpu.matmul %85, %86, %cst_42 {dimension_numbers = #tpu.dot_dimension_numbers<[1], [0], [0], [1], [0, 0, 1, 1], [], []>} : vector<16x16xf32>, vector<16x32xf32>, vector<16x32xf32> -> vector<16x32xf32>
    %88 = arith.addf %66, %87 : vector<16x32xf32>
    %89 = arith.addf %7, %88 : vector<16x32xf32>
    %c0_43 = arith.constant 0 : index
    %c0_44 = arith.constant 0 : index
    %c0_45 = arith.constant 0 : index
    %90 = vector.load %arg11[%c0_43, %c0_44, %c0_45] : memref<2x1x32xf32, #tpu.memory_space<vmem>>, vector<1x1x32xf32>
    %91 = vector.shape_cast %90 : vector<1x1x32xf32> to vector<1x32xf32>
    %92 = vector.broadcast %91 : vector<1x32xf32> to vector<16x32xf32>
    %93 = arith.addf %89, %92 : vector<16x32xf32>
    %c0_46 = arith.constant 0 : index
    %c0_47 = arith.constant 0 : index
    %c0_48 = arith.constant 0 : index
    %94 = vector.load %arg12[%c0_46, %c0_47, %c0_48] : memref<2x1x32xf32, #tpu.memory_space<vmem>>, vector<1x1x32xf32>
    %95 = vector.shape_cast %94 : vector<1x1x32xf32> to vector<1x32xf32>
    %c0_49 = arith.constant 0 : index
    %c0_50 = arith.constant 0 : index
    %c0_51 = arith.constant 0 : index
    %96 = vector.load %arg13[%c0_49, %c0_50, %c0_51] : memref<2x1x32xf32, #tpu.memory_space<vmem>>, vector<1x1x32xf32>
    %97 = vector.shape_cast %96 : vector<1x1x32xf32> to vector<1x32xf32>
    %cst_52 = arith.constant dense<0.000000e+00> : vector<16xf32>
    %98 = vector.multi_reduction <add>, %93, %cst_52 [1] : vector<16x32xf32> to vector<16xf32>
    %99 = vector.shape_cast %98 : vector<16xf32> to vector<16x1xf32>
    %cst_53 = arith.constant 3.200000e+01 : f32
    %100 = vector.broadcast %cst_53 : f32 to vector<16x1xf32>
    %101 = arith.divf %99, %100 : vector<16x1xf32>
    %102 = vector.broadcast %101 : vector<16x1xf32> to vector<16x32xf32>
    %103 = arith.subf %93, %102 : vector<16x32xf32>
    %104 = arith.mulf %103, %103 : vector<16x32xf32>
    %cst_54 = arith.constant dense<0.000000e+00> : vector<16xf32>
    %105 = vector.multi_reduction <add>, %104, %cst_54 [1] : vector<16x32xf32> to vector<16xf32>
    %106 = vector.shape_cast %105 : vector<16xf32> to vector<16x1xf32>
    %cst_55 = arith.constant 3.200000e+01 : f32
    %107 = vector.broadcast %cst_55 : f32 to vector<16x1xf32>
    %108 = arith.divf %106, %107 : vector<16x1xf32>
    %109 = vector.broadcast %101 : vector<16x1xf32> to vector<16x32xf32>
    %110 = arith.subf %93, %109 : vector<16x32xf32>
    %cst_56 = arith.constant 9.99999974E-6 : f32
    %111 = vector.broadcast %cst_56 : f32 to vector<16x1xf32>
    %112 = arith.addf %108, %111 : vector<16x1xf32>
    %113 = math.rsqrt %112 : vector<16x1xf32>
    %114 = vector.broadcast %113 : vector<16x1xf32> to vector<16x32xf32>
    %115 = arith.mulf %110, %114 : vector<16x32xf32>
    %116 = vector.broadcast %95 : vector<1x32xf32> to vector<16x32xf32>
    %117 = arith.mulf %115, %116 : vector<16x32xf32>
    %118 = vector.broadcast %97 : vector<1x32xf32> to vector<16x32xf32>
    %119 = arith.addf %117, %118 : vector<16x32xf32>
    %c0_57 = arith.constant 0 : index
    %c0_58 = arith.constant 0 : index
    %c0_59 = arith.constant 0 : index
    %120 = vector.load %arg14[%c0_57, %c0_58, %c0_59] : memref<2x32x128xf32, #tpu.memory_space<vmem>>, vector<1x32x128xf32>
    %121 = vector.shape_cast %120 : vector<1x32x128xf32> to vector<32x128xf32>
    %cst_60 = arith.constant dense<0.000000e+00> : vector<16x128xf32>
    %122 = tpu.matmul %119, %121, %cst_60 {dimension_numbers = #tpu.dot_dimension_numbers<[1], [0], [0], [1], [0, 0, 1, 1], [], []>} : vector<16x32xf32>, vector<32x128xf32>, vector<16x128xf32> -> vector<16x128xf32>
    %c0_61 = arith.constant 0 : index
    %c0_62 = arith.constant 0 : index
    %c0_63 = arith.constant 0 : index
    %123 = vector.load %arg15[%c0_61, %c0_62, %c0_63] : memref<2x1x128xf32, #tpu.memory_space<vmem>>, vector<1x1x128xf32>
    %124 = vector.shape_cast %123 : vector<1x1x128xf32> to vector<1x128xf32>
    %125 = vector.broadcast %124 : vector<1x128xf32> to vector<16x128xf32>
    %126 = arith.addf %122, %125 : vector<16x128xf32>
    %cst_64 = arith.constant 5.000000e-01 : f32
    %127 = vector.broadcast %cst_64 : f32 to vector<16x128xf32>
    %128 = arith.mulf %127, %126 : vector<16x128xf32>
    %cst_65 = arith.constant 4.471500e-02 : f32
    %129 = vector.broadcast %cst_65 : f32 to vector<16x128xf32>
    %130 = arith.mulf %129, %126 : vector<16x128xf32>
    %131 = arith.mulf %130, %126 : vector<16x128xf32>
    %132 = arith.mulf %131, %126 : vector<16x128xf32>
    %133 = arith.addf %126, %132 : vector<16x128xf32>
    %cst_66 = arith.constant 0.797884583 : f32
    %134 = vector.broadcast %cst_66 : f32 to vector<16x128xf32>
    %135 = arith.mulf %134, %133 : vector<16x128xf32>
    %136 = math.tanh %135 : vector<16x128xf32>
    %cst_67 = arith.constant 1.000000e+00 : f32
    %137 = vector.broadcast %cst_67 : f32 to vector<16x128xf32>
    %138 = arith.addf %137, %136 : vector<16x128xf32>
    %139 = arith.mulf %128, %138 : vector<16x128xf32>
    %c0_68 = arith.constant 0 : index
    %c0_69 = arith.constant 0 : index
    %c0_70 = arith.constant 0 : index
    %140 = vector.load %arg16[%c0_68, %c0_69, %c0_70] : memref<2x128x32xf32, #tpu.memory_space<vmem>>, vector<1x128x32xf32>
    %141 = vector.shape_cast %140 : vector<1x128x32xf32> to vector<128x32xf32>
    %cst_71 = arith.constant dense<0.000000e+00> : vector<16x32xf32>
    %142 = tpu.matmul %139, %141, %cst_71 {dimension_numbers = #tpu.dot_dimension_numbers<[1], [0], [0], [1], [0, 0, 1, 1], [], []>} : vector<16x128xf32>, vector<128x32xf32>, vector<16x32xf32> -> vector<16x32xf32>
    %143 = arith.addf %93, %142 : vector<16x32xf32>
    %c0_72 = arith.constant 0 : index
    %c0_73 = arith.constant 0 : index
    %c0_74 = arith.constant 0 : index
    %144 = vector.load %arg17[%c0_72, %c0_73, %c0_74] : memref<2x1x32xf32, #tpu.memory_space<vmem>>, vector<1x1x32xf32>
    %145 = vector.shape_cast %144 : vector<1x1x32xf32> to vector<1x32xf32>
    %146 = vector.broadcast %145 : vector<1x32xf32> to vector<16x32xf32>
    %147 = arith.addf %143, %146 : vector<16x32xf32>
    %c1 = arith.constant 1 : index
    %c0_75 = arith.constant 0 : index
    %c0_76 = arith.constant 0 : index
    %148 = vector.load %arg6[%c1, %c0_75, %c0_76] : memref<2x1x32xf32, #tpu.memory_space<vmem>>, vector<1x1x32xf32>
    %149 = vector.shape_cast %148 : vector<1x1x32xf32> to vector<1x32xf32>
    %c1_77 = arith.constant 1 : index
    %c0_78 = arith.constant 0 : index
    %c0_79 = arith.constant 0 : index
    %150 = vector.load %arg7[%c1_77, %c0_78, %c0_79] : memref<2x1x32xf32, #tpu.memory_space<vmem>>, vector<1x1x32xf32>
    %151 = vector.shape_cast %150 : vector<1x1x32xf32> to vector<1x32xf32>
    %cst_80 = arith.constant dense<0.000000e+00> : vector<16xf32>
    %152 = vector.multi_reduction <add>, %147, %cst_80 [1] : vector<16x32xf32> to vector<16xf32>
    %153 = vector.shape_cast %152 : vector<16xf32> to vector<16x1xf32>
    %cst_81 = arith.constant 3.200000e+01 : f32
    %154 = vector.broadcast %cst_81 : f32 to vector<16x1xf32>
    %155 = arith.divf %153, %154 : vector<16x1xf32>
    %156 = vector.broadcast %155 : vector<16x1xf32> to vector<16x32xf32>
    %157 = arith.subf %147, %156 : vector<16x32xf32>
    %158 = arith.mulf %157, %157 : vector<16x32xf32>
    %cst_82 = arith.constant dense<0.000000e+00> : vector<16xf32>
    %159 = vector.multi_reduction <add>, %158, %cst_82 [1] : vector<16x32xf32> to vector<16xf32>
    %160 = vector.shape_cast %159 : vector<16xf32> to vector<16x1xf32>
    %cst_83 = arith.constant 3.200000e+01 : f32
    %161 = vector.broadcast %cst_83 : f32 to vector<16x1xf32>
    %162 = arith.divf %160, %161 : vector<16x1xf32>
    %163 = vector.broadcast %155 : vector<16x1xf32> to vector<16x32xf32>
    %164 = arith.subf %147, %163 : vector<16x32xf32>
    %cst_84 = arith.constant 9.99999974E-6 : f32
    %165 = vector.broadcast %cst_84 : f32 to vector<16x1xf32>
    %166 = arith.addf %162, %165 : vector<16x1xf32>
    %167 = math.rsqrt %166 : vector<16x1xf32>
    %168 = vector.broadcast %167 : vector<16x1xf32> to vector<16x32xf32>
    %169 = arith.mulf %164, %168 : vector<16x32xf32>
    %170 = vector.broadcast %149 : vector<1x32xf32> to vector<16x32xf32>
    %171 = arith.mulf %169, %170 : vector<16x32xf32>
    %172 = vector.broadcast %151 : vector<1x32xf32> to vector<16x32xf32>
    %173 = arith.addf %171, %172 : vector<16x32xf32>
    %c1_85 = arith.constant 1 : index
    %c0_86 = arith.constant 0 : index
    %c0_87 = arith.constant 0 : index
    %174 = vector.load %arg8[%c1_85, %c0_86, %c0_87] : memref<2x32x96xf32, #tpu.memory_space<vmem>>, vector<1x32x96xf32>
    %175 = vector.shape_cast %174 : vector<1x32x96xf32> to vector<32x96xf32>
    %cst_88 = arith.constant dense<0.000000e+00> : vector<16x96xf32>
    %176 = tpu.matmul %173, %175, %cst_88 {dimension_numbers = #tpu.dot_dimension_numbers<[1], [0], [0], [1], [0, 0, 1, 1], [], []>} : vector<16x32xf32>, vector<32x96xf32>, vector<16x96xf32> -> vector<16x96xf32>
    %c1_89 = arith.constant 1 : index
    %c0_90 = arith.constant 0 : index
    %c0_91 = arith.constant 0 : index
    %177 = vector.load %arg9[%c1_89, %c0_90, %c0_91] : memref<2x1x96xf32, #tpu.memory_space<vmem>>, vector<1x1x96xf32>
    %178 = vector.shape_cast %177 : vector<1x1x96xf32> to vector<1x96xf32>
    %179 = vector.broadcast %178 : vector<1x96xf32> to vector<16x96xf32>
    %180 = arith.addf %176, %179 : vector<16x96xf32>
    %c1_92 = arith.constant 1 : index
    %c0_93 = arith.constant 0 : index
    %c0_94 = arith.constant 0 : index
    %181 = vector.load %arg10[%c1_92, %c0_93, %c0_94] : memref<2x32x32xf32, #tpu.memory_space<vmem>>, vector<1x32x32xf32>
    %182 = vector.shape_cast %181 : vector<1x32x32xf32> to vector<32x32xf32>
    %cst_95 = arith.constant 0.000000e+00 : f32
    %183 = vector.broadcast %cst_95 : f32 to vector<16x32xf32>
    %184 = vector.extract_strided_slice %180 {offsets = [0, 0], sizes = [16, 16], strides = [1, 1]} : vector<16x96xf32> to vector<16x16xf32>
    %185 = vector.extract_strided_slice %180 {offsets = [0, 32], sizes = [16, 16], strides = [1, 1]} : vector<16x96xf32> to vector<16x16xf32>
    %186 = vector.extract_strided_slice %180 {offsets = [0, 64], sizes = [16, 16], strides = [1, 1]} : vector<16x96xf32> to vector<16x16xf32>
    %187 = tpu.transpose %185, [1, 0] : vector<16x16xf32> -> vector<16x16xf32>
    %cst_96 = arith.constant dense<0.000000e+00> : vector<16x16xf32>
    %188 = tpu.matmul %184, %187, %cst_96 {dimension_numbers = #tpu.dot_dimension_numbers<[1], [0], [0], [1], [0, 0, 1, 1], [], []>} : vector<16x16xf32>, vector<16x16xf32>, vector<16x16xf32> -> vector<16x16xf32>
    %cst_97 = arith.constant 2.500000e-01 : f32
    %189 = vector.broadcast %cst_97 : f32 to vector<16x16xf32>
    %190 = arith.mulf %188, %189 : vector<16x16xf32>
    %191 = arith.addf %190, %8 : vector<16x16xf32>
    %cst_98 = arith.constant dense<0xFF800000> : vector<16xf32>
    %192 = vector.multi_reduction <maximumf>, %191, %cst_98 [1] : vector<16x16xf32> to vector<16xf32>
    %193 = vector.shape_cast %192 : vector<16xf32> to vector<16x1xf32>
    %194 = vector.broadcast %193 : vector<16x1xf32> to vector<16x16xf32>
    %195 = arith.subf %191, %194 : vector<16x16xf32>
    %196 = math.exp %195 : vector<16x16xf32>
    %cst_99 = arith.constant dense<0.000000e+00> : vector<16xf32>
    %197 = vector.multi_reduction <add>, %196, %cst_99 [1] : vector<16x16xf32> to vector<16xf32>
    %198 = vector.shape_cast %197 : vector<16xf32> to vector<16x1xf32>
    %199 = tpu.reciprocal %198 {approx = true} : vector<16x1xf32> -> vector<16x1xf32>
    %200 = vector.broadcast %199 : vector<16x1xf32> to vector<16x16xf32>
    %201 = arith.mulf %196, %200 : vector<16x16xf32>
    %cst_100 = arith.constant dense<0.000000e+00> : vector<16x16xf32>
    %202 = tpu.matmul %201, %186, %cst_100 {dimension_numbers = #tpu.dot_dimension_numbers<[1], [0], [0], [1], [0, 0, 1, 1], [], []>} : vector<16x16xf32>, vector<16x16xf32>, vector<16x16xf32> -> vector<16x16xf32>
    %203 = vector.extract_strided_slice %182 {offsets = [0, 0], sizes = [16, 32], strides = [1, 1]} : vector<32x32xf32> to vector<16x32xf32>
    %cst_101 = arith.constant dense<0.000000e+00> : vector<16x32xf32>
    %204 = tpu.matmul %202, %203, %cst_101 {dimension_numbers = #tpu.dot_dimension_numbers<[1], [0], [0], [1], [0, 0, 1, 1], [], []>} : vector<16x16xf32>, vector<16x32xf32>, vector<16x32xf32> -> vector<16x32xf32>
    %205 = arith.addf %183, %204 : vector<16x32xf32>
    %206 = vector.extract_strided_slice %180 {offsets = [0, 16], sizes = [16, 16], strides = [1, 1]} : vector<16x96xf32> to vector<16x16xf32>
    %207 = vector.extract_strided_slice %180 {offsets = [0, 48], sizes = [16, 16], strides = [1, 1]} : vector<16x96xf32> to vector<16x16xf32>
    %208 = vector.extract_strided_slice %180 {offsets = [0, 80], sizes = [16, 16], strides = [1, 1]} : vector<16x96xf32> to vector<16x16xf32>
    %209 = tpu.transpose %207, [1, 0] : vector<16x16xf32> -> vector<16x16xf32>
    %cst_102 = arith.constant dense<0.000000e+00> : vector<16x16xf32>
    %210 = tpu.matmul %206, %209, %cst_102 {dimension_numbers = #tpu.dot_dimension_numbers<[1], [0], [0], [1], [0, 0, 1, 1], [], []>} : vector<16x16xf32>, vector<16x16xf32>, vector<16x16xf32> -> vector<16x16xf32>
    %cst_103 = arith.constant 2.500000e-01 : f32
    %211 = vector.broadcast %cst_103 : f32 to vector<16x16xf32>
    %212 = arith.mulf %210, %211 : vector<16x16xf32>
    %213 = arith.addf %212, %8 : vector<16x16xf32>
    %cst_104 = arith.constant dense<0xFF800000> : vector<16xf32>
    %214 = vector.multi_reduction <maximumf>, %213, %cst_104 [1] : vector<16x16xf32> to vector<16xf32>
    %215 = vector.shape_cast %214 : vector<16xf32> to vector<16x1xf32>
    %216 = vector.broadcast %215 : vector<16x1xf32> to vector<16x16xf32>
    %217 = arith.subf %213, %216 : vector<16x16xf32>
    %218 = math.exp %217 : vector<16x16xf32>
    %cst_105 = arith.constant dense<0.000000e+00> : vector<16xf32>
    %219 = vector.multi_reduction <add>, %218, %cst_105 [1] : vector<16x16xf32> to vector<16xf32>
    %220 = vector.shape_cast %219 : vector<16xf32> to vector<16x1xf32>
    %221 = tpu.reciprocal %220 {approx = true} : vector<16x1xf32> -> vector<16x1xf32>
    %222 = vector.broadcast %221 : vector<16x1xf32> to vector<16x16xf32>
    %223 = arith.mulf %218, %222 : vector<16x16xf32>
    %cst_106 = arith.constant dense<0.000000e+00> : vector<16x16xf32>
    %224 = tpu.matmul %223, %208, %cst_106 {dimension_numbers = #tpu.dot_dimension_numbers<[1], [0], [0], [1], [0, 0, 1, 1], [], []>} : vector<16x16xf32>, vector<16x16xf32>, vector<16x16xf32> -> vector<16x16xf32>
    %225 = vector.extract_strided_slice %182 {offsets = [16, 0], sizes = [16, 32], strides = [1, 1]} : vector<32x32xf32> to vector<16x32xf32>
    %cst_107 = arith.constant dense<0.000000e+00> : vector<16x32xf32>
    %226 = tpu.matmul %224, %225, %cst_107 {dimension_numbers = #tpu.dot_dimension_numbers<[1], [0], [0], [1], [0, 0, 1, 1], [], []>} : vector<16x16xf32>, vector<16x32xf32>, vector<16x32xf32> -> vector<16x32xf32>
    %227 = arith.addf %205, %226 : vector<16x32xf32>
    %228 = arith.addf %147, %227 : vector<16x32xf32>
    %c1_108 = arith.constant 1 : index
    %c0_109 = arith.constant 0 : index
    %c0_110 = arith.constant 0 : index
    %229 = vector.load %arg11[%c1_108, %c0_109, %c0_110] : memref<2x1x32xf32, #tpu.memory_space<vmem>>, vector<1x1x32xf32>
    %230 = vector.shape_cast %229 : vector<1x1x32xf32> to vector<1x32xf32>
    %231 = vector.broadcast %230 : vector<1x32xf32> to vector<16x32xf32>
    %232 = arith.addf %228, %231 : vector<16x32xf32>
    %c1_111 = arith.constant 1 : index
    %c0_112 = arith.constant 0 : index
    %c0_113 = arith.constant 0 : index
    %233 = vector.load %arg12[%c1_111, %c0_112, %c0_113] : memref<2x1x32xf32, #tpu.memory_space<vmem>>, vector<1x1x32xf32>
    %234 = vector.shape_cast %233 : vector<1x1x32xf32> to vector<1x32xf32>
    %c1_114 = arith.constant 1 : index
    %c0_115 = arith.constant 0 : index
    %c0_116 = arith.constant 0 : index
    %235 = vector.load %arg13[%c1_114, %c0_115, %c0_116] : memref<2x1x32xf32, #tpu.memory_space<vmem>>, vector<1x1x32xf32>
    %236 = vector.shape_cast %235 : vector<1x1x32xf32> to vector<1x32xf32>
    %cst_117 = arith.constant dense<0.000000e+00> : vector<16xf32>
    %237 = vector.multi_reduction <add>, %232, %cst_117 [1] : vector<16x32xf32> to vector<16xf32>
    %238 = vector.shape_cast %237 : vector<16xf32> to vector<16x1xf32>
    %cst_118 = arith.constant 3.200000e+01 : f32
    %239 = vector.broadcast %cst_118 : f32 to vector<16x1xf32>
    %240 = arith.divf %238, %239 : vector<16x1xf32>
    %241 = vector.broadcast %240 : vector<16x1xf32> to vector<16x32xf32>
    %242 = arith.subf %232, %241 : vector<16x32xf32>
    %243 = arith.mulf %242, %242 : vector<16x32xf32>
    %cst_119 = arith.constant dense<0.000000e+00> : vector<16xf32>
    %244 = vector.multi_reduction <add>, %243, %cst_119 [1] : vector<16x32xf32> to vector<16xf32>
    %245 = vector.shape_cast %244 : vector<16xf32> to vector<16x1xf32>
    %cst_120 = arith.constant 3.200000e+01 : f32
    %246 = vector.broadcast %cst_120 : f32 to vector<16x1xf32>
    %247 = arith.divf %245, %246 : vector<16x1xf32>
    %248 = vector.broadcast %240 : vector<16x1xf32> to vector<16x32xf32>
    %249 = arith.subf %232, %248 : vector<16x32xf32>
    %cst_121 = arith.constant 9.99999974E-6 : f32
    %250 = vector.broadcast %cst_121 : f32 to vector<16x1xf32>
    %251 = arith.addf %247, %250 : vector<16x1xf32>
    %252 = math.rsqrt %251 : vector<16x1xf32>
    %253 = vector.broadcast %252 : vector<16x1xf32> to vector<16x32xf32>
    %254 = arith.mulf %249, %253 : vector<16x32xf32>
    %255 = vector.broadcast %234 : vector<1x32xf32> to vector<16x32xf32>
    %256 = arith.mulf %254, %255 : vector<16x32xf32>
    %257 = vector.broadcast %236 : vector<1x32xf32> to vector<16x32xf32>
    %258 = arith.addf %256, %257 : vector<16x32xf32>
    %c1_122 = arith.constant 1 : index
    %c0_123 = arith.constant 0 : index
    %c0_124 = arith.constant 0 : index
    %259 = vector.load %arg14[%c1_122, %c0_123, %c0_124] : memref<2x32x128xf32, #tpu.memory_space<vmem>>, vector<1x32x128xf32>
    %260 = vector.shape_cast %259 : vector<1x32x128xf32> to vector<32x128xf32>
    %cst_125 = arith.constant dense<0.000000e+00> : vector<16x128xf32>
    %261 = tpu.matmul %258, %260, %cst_125 {dimension_numbers = #tpu.dot_dimension_numbers<[1], [0], [0], [1], [0, 0, 1, 1], [], []>} : vector<16x32xf32>, vector<32x128xf32>, vector<16x128xf32> -> vector<16x128xf32>
    %c1_126 = arith.constant 1 : index
    %c0_127 = arith.constant 0 : index
    %c0_128 = arith.constant 0 : index
    %262 = vector.load %arg15[%c1_126, %c0_127, %c0_128] : memref<2x1x128xf32, #tpu.memory_space<vmem>>, vector<1x1x128xf32>
    %263 = vector.shape_cast %262 : vector<1x1x128xf32> to vector<1x128xf32>
    %264 = vector.broadcast %263 : vector<1x128xf32> to vector<16x128xf32>
    %265 = arith.addf %261, %264 : vector<16x128xf32>
    %cst_129 = arith.constant 5.000000e-01 : f32
    %266 = vector.broadcast %cst_129 : f32 to vector<16x128xf32>
    %267 = arith.mulf %266, %265 : vector<16x128xf32>
    %cst_130 = arith.constant 4.471500e-02 : f32
    %268 = vector.broadcast %cst_130 : f32 to vector<16x128xf32>
    %269 = arith.mulf %268, %265 : vector<16x128xf32>
    %270 = arith.mulf %269, %265 : vector<16x128xf32>
    %271 = arith.mulf %270, %265 : vector<16x128xf32>
    %272 = arith.addf %265, %271 : vector<16x128xf32>
    %cst_131 = arith.constant 0.797884583 : f32
    %273 = vector.broadcast %cst_131 : f32 to vector<16x128xf32>
    %274 = arith.mulf %273, %272 : vector<16x128xf32>
    %275 = math.tanh %274 : vector<16x128xf32>
    %cst_132 = arith.constant 1.000000e+00 : f32
    %276 = vector.broadcast %cst_132 : f32 to vector<16x128xf32>
    %277 = arith.addf %276, %275 : vector<16x128xf32>
    %278 = arith.mulf %267, %277 : vector<16x128xf32>
    %c1_133 = arith.constant 1 : index
    %c0_134 = arith.constant 0 : index
    %c0_135 = arith.constant 0 : index
    %279 = vector.load %arg16[%c1_133, %c0_134, %c0_135] : memref<2x128x32xf32, #tpu.memory_space<vmem>>, vector<1x128x32xf32>
    %280 = vector.shape_cast %279 : vector<1x128x32xf32> to vector<128x32xf32>
    %cst_136 = arith.constant dense<0.000000e+00> : vector<16x32xf32>
    %281 = tpu.matmul %278, %280, %cst_136 {dimension_numbers = #tpu.dot_dimension_numbers<[1], [0], [0], [1], [0, 0, 1, 1], [], []>} : vector<16x128xf32>, vector<128x32xf32>, vector<16x32xf32> -> vector<16x32xf32>
    %282 = arith.addf %232, %281 : vector<16x32xf32>
    %c1_137 = arith.constant 1 : index
    %c0_138 = arith.constant 0 : index
    %c0_139 = arith.constant 0 : index
    %283 = vector.load %arg17[%c1_137, %c0_138, %c0_139] : memref<2x1x32xf32, #tpu.memory_space<vmem>>, vector<1x1x32xf32>
    %284 = vector.shape_cast %283 : vector<1x1x32xf32> to vector<1x32xf32>
    %285 = vector.broadcast %284 : vector<1x32xf32> to vector<16x32xf32>
    %286 = arith.addf %282, %285 : vector<16x32xf32>
    %c0_140 = arith.constant 0 : index
    %c0_141 = arith.constant 0 : index
    %287 = vector.load %arg18[%c0_140, %c0_141] : memref<1x32xf32, #tpu.memory_space<vmem>>, vector<1x32xf32>
    %c0_142 = arith.constant 0 : index
    %c0_143 = arith.constant 0 : index
    %288 = vector.load %arg19[%c0_142, %c0_143] : memref<1x32xf32, #tpu.memory_space<vmem>>, vector<1x32xf32>
    %cst_144 = arith.constant dense<0.000000e+00> : vector<16xf32>
    %289 = vector.multi_reduction <add>, %286, %cst_144 [1] : vector<16x32xf32> to vector<16xf32>
    %290 = vector.shape_cast %289 : vector<16xf32> to vector<16x1xf32>
    %cst_145 = arith.constant 3.200000e+01 : f32
    %291 = vector.broadcast %cst_145 : f32 to vector<16x1xf32>
    %292 = arith.divf %290, %291 : vector<16x1xf32>
    %293 = vector.broadcast %292 : vector<16x1xf32> to vector<16x32xf32>
    %294 = arith.subf %286, %293 : vector<16x32xf32>
    %295 = arith.mulf %294, %294 : vector<16x32xf32>
    %cst_146 = arith.constant dense<0.000000e+00> : vector<16xf32>
    %296 = vector.multi_reduction <add>, %295, %cst_146 [1] : vector<16x32xf32> to vector<16xf32>
    %297 = vector.shape_cast %296 : vector<16xf32> to vector<16x1xf32>
    %cst_147 = arith.constant 3.200000e+01 : f32
    %298 = vector.broadcast %cst_147 : f32 to vector<16x1xf32>
    %299 = arith.divf %297, %298 : vector<16x1xf32>
    %300 = vector.broadcast %292 : vector<16x1xf32> to vector<16x32xf32>
    %301 = arith.subf %286, %300 : vector<16x32xf32>
    %cst_148 = arith.constant 9.99999974E-6 : f32
    %302 = vector.broadcast %cst_148 : f32 to vector<16x1xf32>
    %303 = arith.addf %299, %302 : vector<16x1xf32>
    %304 = math.rsqrt %303 : vector<16x1xf32>
    %305 = vector.broadcast %304 : vector<16x1xf32> to vector<16x32xf32>
    %306 = arith.mulf %301, %305 : vector<16x32xf32>
    %307 = vector.broadcast %287 : vector<1x32xf32> to vector<16x32xf32>
    %308 = arith.mulf %306, %307 : vector<16x32xf32>
    %309 = vector.broadcast %288 : vector<1x32xf32> to vector<16x32xf32>
    %310 = arith.addf %308, %309 : vector<16x32xf32>
    %c0_149 = arith.constant 0 : index
    %c0_150 = arith.constant 0 : index
    %311 = vector.load %arg22[%c0_149, %c0_150] : memref<16x32xf32, #tpu.memory_space<vmem>>, vector<16x32xf32>
    tpu.vector_store %arg22[%c0_149, %c0_150], %310 {strides = array<i32>} : memref<16x32xf32, #tpu.memory_space<vmem>>, vector<16x32xf32>,
    %c0_151 = arith.constant 0 : index
    %c0_152 = arith.constant 0 : index
    %312 = vector.load %arg20[%c0_151, %c0_152] : memref<32x128xf32, #tpu.memory_space<vmem>>, vector<32x128xf32>
    %cst_153 = arith.constant dense<0.000000e+00> : vector<16x128xf32>
    %313 = tpu.matmul %310, %312, %cst_153 {dimension_numbers = #tpu.dot_dimension_numbers<[1], [0], [0], [1], [0, 0, 1, 1], [], []>} : vector<16x32xf32>, vector<32x128xf32>, vector<16x128xf32> -> vector<16x128xf32>
    %c0_154 = arith.constant 0 : index
    %c0_155 = arith.constant 0 : index
    %314 = vector.load %arg21[%c0_154, %c0_155] : memref<1x128xf32, #tpu.memory_space<vmem>>, vector<1x128xf32>
    %315 = vector.broadcast %314 : vector<1x128xf32> to vector<16x128xf32>
    %316 = arith.addf %313, %315 : vector<16x128xf32>
    %c0_156 = arith.constant 0 : index
    %c0_157 = arith.constant 0 : index
    %317 = vector.load %arg23[%c0_156, %c0_157] : memref<16x128xf32, #tpu.memory_space<vmem>>, vector<16x128xf32>
    tpu.vector_store %arg23[%c0_156, %c0_157], %316 {strides = array<i32>} : memref<16x128xf32, #tpu.memory_space<vmem>>, vector<16x128xf32>,
    return
  }
  func.func @transform_0(%arg0: i32) -> (i32, i32) {
    %c0_i32 = arith.constant 0 : i32
    %c0_i32_0 = arith.constant 0 : i32
    %c0_i32_1 = arith.constant 0 : i32
    return %c0_i32, %c0_i32_0 : i32, i32
  }
  func.func @transform_1(%arg0: i32) -> (i32, i32) {
    %c0_i32 = arith.constant 0 : i32
    %c0_i32_0 = arith.constant 0 : i32
    %c0_i32_1 = arith.constant 0 : i32
    return %c0_i32, %c0_i32_0 : i32, i32
  }
  func.func @transform_2(%arg0: i32) -> (i32, i32) {
    %c0_i32 = arith.constant 0 : i32
    %c0_i32_0 = arith.constant 0 : i32
    %c0_i32_1 = arith.constant 0 : i32
    return %c0_i32, %c0_i32_0 : i32, i32
  }
  func.func @transform_3(%arg0: i32) -> (i32, i32) {
    %c0_i32 = arith.constant 0 : i32
    %c0_i32_0 = arith.constant 0 : i32
    %c0_i32_1 = arith.constant 0 : i32
    return %c0_i32, %c0_i32_0 : i32, i32
  }
  func.func @transform_4(%arg0: i32) -> (i32, i32) {
    %c0_i32 = arith.constant 0 : i32
    %c0_i32_0 = arith.constant 0 : i32
    %c0_i32_1 = arith.constant 0 : i32
    return %c0_i32, %c0_i32_0 : i32, i32
  }
  func.func @transform_5(%arg0: i32) -> (i32, i32, i32) {
    %c0_i32 = arith.constant 0 : i32
    %c0_i32_0 = arith.constant 0 : i32
    %c0_i32_1 = arith.constant 0 : i32
    %c0_i32_2 = arith.constant 0 : i32
    return %c0_i32, %c0_i32_0, %c0_i32_1 : i32, i32, i32
  }
  func.func @transform_6(%arg0: i32) -> (i32, i32, i32) {
    %c0_i32 = arith.constant 0 : i32
    %c0_i32_0 = arith.constant 0 : i32
    %c0_i32_1 = arith.constant 0 : i32
    %c0_i32_2 = arith.constant 0 : i32
    return %c0_i32, %c0_i32_0, %c0_i32_1 : i32, i32, i32
  }
  func.func @transform_7(%arg0: i32) -> (i32, i32, i32) {
    %c0_i32 = arith.constant 0 : i32
    %c0_i32_0 = arith.constant 0 : i32
    %c0_i32_1 = arith.constant 0 : i32
    %c0_i32_2 = arith.constant 0 : i32
    return %c0_i32, %c0_i32_0, %c0_i32_1 : i32, i32, i32
  }
  func.func @transform_8(%arg0: i32) -> (i32, i32, i32) {
    %c0_i32 = arith.constant 0 : i32
    %c0_i32_0 = arith.constant 0 : i32
    %c0_i32_1 = arith.constant 0 : i32
    %c0_i32_2 = arith.constant 0 : i32
    return %c0_i32, %c0_i32_0, %c0_i32_1 : i32, i32, i32
  }
  func.func @transform_9(%arg0: i32) -> (i32, i32, i32) {
    %c0_i32 = arith.constant 0 : i32
    %c0_i32_0 = arith.constant 0 : i32
    %c0_i32_1 = arith.constant 0 : i32
    %c0_i32_2 = arith.constant 0 : i32
    return %c0_i32, %c0_i32_0, %c0_i32_1 : i32, i32, i32
  }
  func.func @transform_10(%arg0: i32) -> (i32, i32, i32) {
    %c0_i32 = arith.constant 0 : i32
    %c0_i32_0 = arith.constant 0 : i32
    %c0_i32_1 = arith.constant 0 : i32
    %c0_i32_2 = arith.constant 0 : i32
    return %c0_i32, %c0_i32_0, %c0_i32_1 : i32, i32, i32
  }
  func.func @transform_11(%arg0: i32) -> (i32, i32, i32) {
    %c0_i32 = arith.constant 0 : i32
    %c0_i32_0 = arith.constant 0 : i32
    %c0_i32_1 = arith.constant 0 : i32
    %c0_i32_2 = arith.constant 0 : i32
    return %c0_i32, %c0_i32_0, %c0_i32_1 : i32, i32, i32
  }
  func.func @transform_12(%arg0: i32) -> (i32, i32, i32) {
    %c0_i32 = arith.constant 0 : i32
    %c0_i32_0 = arith.constant 0 : i32
    %c0_i32_1 = arith.constant 0 : i32
    %c0_i32_2 = arith.constant 0 : i32
    return %c0_i32, %c0_i32_0, %c0_i32_1 : i32, i32, i32
  }
  func.func @transform_13(%arg0: i32) -> (i32, i32, i32) {
    %c0_i32 = arith.constant 0 : i32
    %c0_i32_0 = arith.constant 0 : i32
    %c0_i32_1 = arith.constant 0 : i32
    %c0_i32_2 = arith.constant 0 : i32
    return %c0_i32, %c0_i32_0, %c0_i32_1 : i32, i32, i32
  }
  func.func @transform_14(%arg0: i32) -> (i32, i32, i32) {
    %c0_i32 = arith.constant 0 : i32
    %c0_i32_0 = arith.constant 0 : i32
    %c0_i32_1 = arith.constant 0 : i32
    %c0_i32_2 = arith.constant 0 : i32
    return %c0_i32, %c0_i32_0, %c0_i32_1 : i32, i32, i32
  }
  func.func @transform_15(%arg0: i32) -> (i32, i32, i32) {
    %c0_i32 = arith.constant 0 : i32
    %c0_i32_0 = arith.constant 0 : i32
    %c0_i32_1 = arith.constant 0 : i32
    %c0_i32_2 = arith.constant 0 : i32
    return %c0_i32, %c0_i32_0, %c0_i32_1 : i32, i32, i32
  }
  func.func @transform_16(%arg0: i32) -> (i32, i32, i32) {
    %c0_i32 = arith.constant 0 : i32
    %c0_i32_0 = arith.constant 0 : i32
    %c0_i32_1 = arith.constant 0 : i32
    %c0_i32_2 = arith.constant 0 : i32
    return %c0_i32, %c0_i32_0, %c0_i32_1 : i32, i32, i32
  }
  func.func @transform_17(%arg0: i32) -> (i32, i32) {
    %c0_i32 = arith.constant 0 : i32
    %c0_i32_0 = arith.constant 0 : i32
    %c0_i32_1 = arith.constant 0 : i32
    return %c0_i32, %c0_i32_0 : i32, i32
  }
  func.func @transform_18(%arg0: i32) -> (i32, i32) {
    %c0_i32 = arith.constant 0 : i32
    %c0_i32_0 = arith.constant 0 : i32
    %c0_i32_1 = arith.constant 0 : i32
    return %c0_i32, %c0_i32_0 : i32, i32
  }
  func.func @transform_19(%arg0: i32) -> (i32, i32) {
    %c0_i32 = arith.constant 0 : i32
    %c0_i32_0 = arith.constant 0 : i32
    %c0_i32_1 = arith.constant 0 : i32
    return %c0_i32, %c0_i32_0 : i32, i32
  }
  func.func @transform_20(%arg0: i32) -> (i32, i32) {
    %c0_i32 = arith.constant 0 : i32
    %c0_i32_0 = arith.constant 0 : i32
    %c0_i32_1 = arith.constant 0 : i32
    return %c0_i32, %c0_i32_0 : i32, i32
  }
  func.func @transform_21(%arg0: i32) -> (i32, i32) {
    %c0_i32 = arith.constant 0 : i32
    %c0_i32_0 = arith.constant 0 : i32
    %c0_i32_1 = arith.constant 0 : i32
    return %c0_i32, %c0_i32_0 : i32, i32
  }
  func.func @transform_22(%arg0: i32) -> (i32, i32) {
    %c0_i32 = arith.constant 0 : i32
    %c0_i32_0 = arith.constant 0 : i32
    %c0_i32_1 = arith.constant 0 : i32
    return %c0_i32, %c0_i32_0 : i32, i32
  }
}

</mosaic_0001>

<llo_original>
// kernel: gpt2_multihead_forward.1
$region0: #{gpt2_multihead_forward.1}
  #allocation0 [shape = 'u32[]', space=smem, size = 0x4, offset = 0x4, fixed_abs, tag = 'smem constant byte address 0x4 - core index']
  #allocation1 [shape = 'u32[72,128]{1,0:T(1,128)}', space=vmem, size = 0x9000, scoped, tag = 'internal scratch']
  %s0 = inlined_call_operand.vmem [shape: f32[16,32], index: 0, kind: input, shape index: {}]
  %s1 = inlined_call_operand.vmem [shape: f32[16,24], index: 1, kind: input, shape index: {}]
  %s2 = inlined_call_operand.vmem [shape: f32[16,16], index: 2, kind: input, shape index: {}]
  %s3 = inlined_call_operand.vmem [shape: f32[24,32], index: 3, kind: input, shape index: {}]
  %s4 = inlined_call_operand.vmem [shape: f32[1,32], index: 4, kind: input, shape index: {}]
  %s5 = inlined_call_operand.vmem [shape: f32[2,1,32], index: 5, kind: input, shape index: {}]
  %s6 = inlined_call_operand.vmem [shape: f32[2,1,32], index: 6, kind: input, shape index: {}]
  %s7 = inlined_call_operand.vmem [shape: f32[2,32,96], index: 7, kind: input, shape index: {}]
  %s8 = inlined_call_operand.vmem [shape: f32[2,1,96], index: 8, kind: input, shape index: {}]
  %s9 = inlined_call_operand.vmem [shape: f32[2,32,32], index: 9, kind: input, shape index: {}]
  %s10 = inlined_call_operand.vmem [shape: f32[2,1,32], index: 10, kind: input, shape index: {}]
  %s11 = inlined_call_operand.vmem [shape: f32[2,1,32], index: 11, kind: input, shape index: {}]
  %s12 = inlined_call_operand.vmem [shape: f32[2,1,32], index: 12, kind: input, shape index: {}]
  %s13 = inlined_call_operand.vmem [shape: f32[2,32,128], index: 13, kind: input, shape index: {}]
  %s14 = inlined_call_operand.vmem [shape: f32[2,1,128], index: 14, kind: input, shape index: {}]
  %s15 = inlined_call_operand.vmem [shape: f32[2,128,32], index: 15, kind: input, shape index: {}]
  %s16 = inlined_call_operand.vmem [shape: f32[2,1,32], index: 16, kind: input, shape index: {}]
  %s17 = inlined_call_operand.vmem [shape: f32[1,32], index: 17, kind: input, shape index: {}]
  %s18 = inlined_call_operand.vmem [shape: f32[1,32], index: 18, kind: input, shape index: {}]
  %s19 = inlined_call_operand.vmem [shape: f32[32,128], index: 19, kind: input, shape index: {}]
  %s20 = inlined_call_operand.vmem [shape: f32[1,128], index: 20, kind: input, shape index: {}]
  %s21 = inlined_call_operand.hbm [shape: f32[16,32], index: 21, kind: output, shape index: {0}]
  %s22 = inlined_call_operand.vmem [shape: f32[16,128], index: 22, kind: output, shape index: {1}]
  %23 = xla_tuple %s21, %s22
  %s24 = sld [smem:[#allocation0]]
  $region102: #{gpt2_multihead_forward.1} parent=0
    _
  %s26 = ssub.s32 1, %s24
  %s27 = scalar_select 0, %s26, %s24
  $region1: #{gpt2_multihead_forward.1} parent=0
    #allocation2 [shape = 'u8[8192]{0}', space=vmem, size = 0x2000, scoped, tag = 'output window, operand 0, single buffered']
    #allocation3 [shape = 's32[1]{0}', space=sflag, size = 0x4, scoped, tag = 'scoped memory for gpt2_multihead_forward.1']
    %28 = vsyncpa [#allocation3], 0
    // Predicated region
    $region2: #{gpt2_multihead_forward.1} parent=1 // pred_check
      _
    $region3: #{gpt2_multihead_forward.1} parent=1 // pred_check_branch
      %30 = sbr.rel (0) target = $region5
    $region4: #{gpt2_multihead_forward.1} parent=1 // pred_region
      _
    $region5: #{gpt2_multihead_forward.1} parent=1 // pred_fallthru
      _
    // Predicated region
    $region6: #{gpt2_multihead_forward.1} parent=1 // pred_check
      _
    $region7: #{gpt2_multihead_forward.1} parent=1 // pred_check_branch
      %32 = sbr.rel (0) target = $region9
    $region8: #{gpt2_multihead_forward.1} parent=1 // pred_region
      _
    $region9: #{gpt2_multihead_forward.1} parent=1 // pred_fallthru
      _
    // Predicated region
    $region10: #{gpt2_multihead_forward.1} parent=1 // pred_check
      _
    $region11: #{gpt2_multihead_forward.1} parent=1 // pred_check_branch
      %34 = sbr.rel (0) target = $region13
    $region12: #{gpt2_multihead_forward.1} parent=1 // pred_region
      _
    $region13: #{gpt2_multihead_forward.1} parent=1 // pred_fallthru
      _
    // Predicated region
    $region14: #{gpt2_multihead_forward.1} parent=1 // pred_check
      _
    $region15: #{gpt2_multihead_forward.1} parent=1 // pred_check_branch
      %36 = sbr.rel (0) target = $region17
    $region16: #{gpt2_multihead_forward.1} parent=1 // pred_region
      _
    $region17: #{gpt2_multihead_forward.1} parent=1 // pred_fallthru
      _
    // Predicated region
    $region18: #{gpt2_multihead_forward.1} parent=1 // pred_check
      _
    $region19: #{gpt2_multihead_forward.1} parent=1 // pred_check_branch
      %38 = sbr.rel (0) target = $region21
    $region20: #{gpt2_multihead_forward.1} parent=1 // pred_region
      _
    $region21: #{gpt2_multihead_forward.1} parent=1 // pred_fallthru
      _
    // Predicated region
    $region22: #{gpt2_multihead_forward.1} parent=1 // pred_check
      _
    $region23: #{gpt2_multihead_forward.1} parent=1 // pred_check_branch
      %40 = sbr.rel (0) target = $region25
    $region24: #{gpt2_multihead_forward.1} parent=1 // pred_region
      _
    $region25: #{gpt2_multihead_forward.1} parent=1 // pred_fallthru
      _
    // Predicated region
    $region26: #{gpt2_multihead_forward.1} parent=1 // pred_check
      _
    $region27: #{gpt2_multihead_forward.1} parent=1 // pred_check_branch
      %42 = sbr.rel (0) target = $region29
    $region28: #{gpt2_multihead_forward.1} parent=1 // pred_region
      _
    $region29: #{gpt2_multihead_forward.1} parent=1 // pred_fallthru
      _
    // Predicated region
    $region30: #{gpt2_multihead_forward.1} parent=1 // pred_check
      _
    $region31: #{gpt2_multihead_forward.1} parent=1 // pred_check_branch
      %44 = sbr.rel (0) target = $region33
    $region32: #{gpt2_multihead_forward.1} parent=1 // pred_region
      _
    $region33: #{gpt2_multihead_forward.1} parent=1 // pred_fallthru
      _
    // Predicated region
    $region34: #{gpt2_multihead_forward.1} parent=1 // pred_check
      _
    $region35: #{gpt2_multihead_forward.1} parent=1 // pred_check_branch
      %46 = sbr.rel (0) target = $region37
    $region36: #{gpt2_multihead_forward.1} parent=1 // pred_region
      _
    $region37: #{gpt2_multihead_forward.1} parent=1 // pred_fallthru
      _
    // Predicated region
    $region38: #{gpt2_multihead_forward.1} parent=1 // pred_check
      _
    $region39: #{gpt2_multihead_forward.1} parent=1 // pred_check_branch
      %48 = sbr.rel (0) target = $region41
    $region40: #{gpt2_multihead_forward.1} parent=1 // pred_region
      _
    $region41: #{gpt2_multihead_forward.1} parent=1 // pred_fallthru
      _
    // Predicated region
    $region42: #{gpt2_multihead_forward.1} parent=1 // pred_check
      _
    $region43: #{gpt2_multihead_forward.1} parent=1 // pred_check_branch
      %50 = sbr.rel (0) target = $region45
    $region44: #{gpt2_multihead_forward.1} parent=1 // pred_region
      _
    $region45: #{gpt2_multihead_forward.1} parent=1 // pred_fallthru
      _
    // Predicated region
    $region46: #{gpt2_multihead_forward.1} parent=1 // pred_check
      _
    $region47: #{gpt2_multihead_forward.1} parent=1 // pred_check_branch
      %52 = sbr.rel (0) target = $region49
    $region48: #{gpt2_multihead_forward.1} parent=1 // pred_region
      _
    $region49: #{gpt2_multihead_forward.1} parent=1 // pred_fallthru
      _
    // Predicated region
    $region50: #{gpt2_multihead_forward.1} parent=1 // pred_check
      _
    $region51: #{gpt2_multihead_forward.1} parent=1 // pred_check_branch
      %54 = sbr.rel (0) target = $region53
    $region52: #{gpt2_multihead_forward.1} parent=1 // pred_region
      _
    $region53: #{gpt2_multihead_forward.1} parent=1 // pred_fallthru
      _
    // Predicated region
    $region54: #{gpt2_multihead_forward.1} parent=1 // pred_check
      _
    $region55: #{gpt2_multihead_forward.1} parent=1 // pred_check_branch
      %56 = sbr.rel (0) target = $region57
    $region56: #{gpt2_multihead_forward.1} parent=1 // pred_region
      _
    $region57: #{gpt2_multihead_forward.1} parent=1 // pred_fallthru
      _
    // Predicated region
    $region58: #{gpt2_multihead_forward.1} parent=1 // pred_check
      _
    $region59: #{gpt2_multihead_forward.1} parent=1 // pred_check_branch
      %58 = sbr.rel (0) target = $region61
    $region60: #{gpt2_multihead_forward.1} parent=1 // pred_region
      _
    $region61: #{gpt2_multihead_forward.1} parent=1 // pred_fallthru
      _
    // Predicated region
    $region62: #{gpt2_multihead_forward.1} parent=1 // pred_check
      _
    $region63: #{gpt2_multihead_forward.1} parent=1 // pred_check_branch
      %60 = sbr.rel (0) target = $region65
    $region64: #{gpt2_multihead_forward.1} parent=1 // pred_region
      _
    $region65: #{gpt2_multihead_forward.1} parent=1 // pred_fallthru
      _
    // Predicated region
    $region66: #{gpt2_multihead_forward.1} parent=1 // pred_check
      _
    $region67: #{gpt2_multihead_forward.1} parent=1 // pred_check_branch
      %62 = sbr.rel (0) target = $region69
    $region68: #{gpt2_multihead_forward.1} parent=1 // pred_region
      _
    $region69: #{gpt2_multihead_forward.1} parent=1 // pred_fallthru
      _
    // Predicated region
    $region70: #{gpt2_multihead_forward.1} parent=1 // pred_check
      _
    $region71: #{gpt2_multihead_forward.1} parent=1 // pred_check_branch
      %64 = sbr.rel (0) target = $region73
    $region72: #{gpt2_multihead_forward.1} parent=1 // pred_region
      _
    $region73: #{gpt2_multihead_forward.1} parent=1 // pred_fallthru
      _
    // Predicated region
    $region74: #{gpt2_multihead_forward.1} parent=1 // pred_check
      _
    $region75: #{gpt2_multihead_forward.1} parent=1 // pred_check_branch
      %66 = sbr.rel (0) target = $region77
    $region76: #{gpt2_multihead_forward.1} parent=1 // pred_region
      _
    $region77: #{gpt2_multihead_forward.1} parent=1 // pred_fallthru
      _
    // Predicated region
    $region78: #{gpt2_multihead_forward.1} parent=1 // pred_check
      _
    $region79: #{gpt2_multihead_forward.1} parent=1 // pred_check_branch
      %68 = sbr.rel (0) target = $region81
    $region80: #{gpt2_multihead_forward.1} parent=1 // pred_region
      _
    $region81: #{gpt2_multihead_forward.1} parent=1 // pred_fallthru
      _
    // Predicated region
    $region82: #{gpt2_multihead_forward.1} parent=1 // pred_check
      _
    $region83: #{gpt2_multihead_forward.1} parent=1 // pred_check_branch
      %70 = sbr.rel (0) target = $region85
    $region84: #{gpt2_multihead_forward.1} parent=1 // pred_region
      _
    $region85: #{gpt2_multihead_forward.1} parent=1 // pred_fallthru
      _
    %v71 = vld [vmem:[%s0] sm:$0xff]
    %v72 = vld [vmem:[%s0 + $0x8] sm:$0xff]
    %v73 = vld [vmem:[%s1] sm:$0xff]
    %v74 = vld [vmem:[%s1 + $0x8] sm:$0xff]
    %v75 = vld [vmem:[%s3] sm:$0xff]
    %v76 = vld [vmem:[%s3 + $0x8] sm:$0xff]
    %v77 = vld [vmem:[%s3 + $0x10] sm:$0xff]
    %vm78 = vcmask 195584
    %v80 = vsel %vm78, %v73, 0
    %v83 = vsel %vm78, %v74, 0
    %85 = vmatpush.msra.mxu0 0.0
    %86 = vmatpush.msra.mxu0 0.0
    %87 = vmatpush.msra.mxu0 0.0
    %88 = vmatpush.msra.mxu0 0.0
    %89 = vmatpush.msra.mxu0 0.0
    %90 = vmatpush.msra.mxu0 0.0
    %91 = vmatpush.msra.mxu0 0.0
    %92 = vmatpush.msra.mxu0 0.0
    %93 = vmatpush.msra.mxu0 0.0
    %94 = vmatpush.msra.mxu0 0.0
    %95 = vmatpush.msra.mxu0 0.0
    %96 = vmatpush.msra.mxu0 0.0
    %97 = vmatpush.msra.mxu0 0.0
    %98 = vmatpush.msra.mxu0 %v77
    %99 = vmatpush.msra.mxu0 %v76
    %100 = vmatpush.msra.mxu0 %v75
    %101 = vmatmul.f32.gmra.mxu0 %v80
    %v102 = vpop.f32.mrf.mxu0
    %v103 = vadd.f32 0.0, %v102
    %104 = vmatmul.f32.gmra.mxu0 %v83
    %v105 = vpop.f32.mrf.mxu0
    %v106 = vadd.f32 0.0, %v105
    %107 = vdwg.mxu0
    %v108 = vadd.f32 %v71, %v103
    %v109 = vadd.f32 %v72, %v106
    %v110 = vld [vmem:[%s4] sm:$0x1]
    %v112 = vperm.slane %v110, 0
    %v114 = vadd.f32 %v108, %v112
    %v115 = vadd.f32 %v109, %v112
    %v116 = vld [vmem:[%s2] sm:$0xff]
    %v117 = vld [vmem:[%s2 + $0x8] sm:$0xff]
    %v118 = vld [vmem:[%s5] sm:$0x1]
    %v119 = vld [vmem:[%s6] sm:$0x1]
    %vm120 = vcmask 261120
    %v121 = vsel %vm120, %v114, 0.0
    %122 = vadd.xlane.f32.xlu0 %v121
    %v123 = vpop.xlane.xlu0 %122
    %v124 = vsel %vm120, %v115, 0.0
    %125 = vadd.xlane.f32.xlu0 %v124
    %v126 = vpop.xlane.xlu0 %125
    %v127 = vrcp.pop 32.0
    %v128 = vmul.f32 32.0, %v127
    %v129 = vsub.f32 1.0, %v128
    %v130 = vmul.f32 %v127, %v129
    %v131 = vadd.f32 %v127, %v130
    %vm132 = vweird.f32 %v127
    %v133 = vsel %vm132, %v127, %v131
    %v134 = vmul.f32 %v123, %v133
    %v135 = vmul.f32 %v126, %v133
    %v136 = vsub.f32 %v114, %v134
    %v137 = vsub.f32 %v115, %v135
    %v138 = vmul.f32 %v136, %v136
    %v139 = vmul.f32 %v137, %v137
    %v140 = vsel %vm120, %v138, 0.0
    %141 = vadd.xlane.f32.xlu0 %v140
    %v142 = vpop.xlane.xlu0 %141
    %v143 = vsel %vm120, %v139, 0.0
    %144 = vadd.xlane.f32.xlu0 %v143
    %v145 = vpop.xlane.xlu0 %144
    %v146 = vmul.f32 %v142, %v133
    %v147 = vmul.f32 %v145, %v133
    %v148 = vadd.f32 %v146, 1e-05
    %v149 = vadd.f32 %v147, 1e-05
    %v150 = vrsqrt.pop %v148
    %v151 = vmul.f32 %v150, %v148
    %v152 = vmul.f32 %v151, %v150
    %v153 = vmul.f32 0.5, %v152
    %v154 = vsub.f32 1.5, %v153
    %v155 = vmul.f32 %v150, %v154
    %vm156 = vweird.f32 %v148
    %vm157 = vweird.f32 %v150
    %vm158 = vmor %vm156, %vm157
    %v159 = vsel %vm158, %v150, %v155
    %v160 = vrsqrt.pop %v149
    %v161 = vmul.f32 %v160, %v149
    %v162 = vmul.f32 %v161, %v160
    %v163 = vmul.f32 0.5, %v162
    %v164 = vsub.f32 1.5, %v163
    %v165 = vmul.f32 %v160, %v164
    %vm166 = vweird.f32 %v149
    %vm167 = vweird.f32 %v160
    %vm168 = vmor %vm166, %vm167
    %v169 = vsel %vm168, %v160, %v165
    %v170 = vmul.f32 %v136, %v159
    %v171 = vmul.f32 %v137, %v169
    %v173 = vperm.slane %v118, 0
    %v175 = vmul.f32 %v170, %v173
    %v176 = vmul.f32 %v171, %v173
    %v178 = vperm.slane %v119, 0
    %v180 = vadd.f32 %v175, %v178
    %v181 = vadd.f32 %v176, %v178
    %v182 = vld [vmem:[%s7] sm:$0xff]
    %v183 = vld [vmem:[%s7 + $0x8] sm:$0xff]
    %v184 = vld [vmem:[%s7 + $0x10] sm:$0xff]
    %v185 = vld [vmem:[%s7 + $0x18] sm:$0xff]
    %v186 = vld [vmem:[%s8] sm:$0x1]
    %v188 = vperm.slane %v186, 0
    %v191 = vsel %vm120, %v180, 0
    %v194 = vsel %vm120, %v181, 0
    %196 = vmatpush.msra.mxu0 0.0
    %197 = vmatpush.msra.mxu0 0.0
    %198 = vmatpush.msra.mxu0 0.0
    %199 = vmatpush.msra.mxu0 0.0
    %200 = vmatpush.msra.mxu0 0.0
    %201 = vmatpush.msra.mxu0 0.0
    %202 = vmatpush.msra.mxu0 0.0
    %203 = vmatpush.msra.mxu0 0.0
    %204 = vmatpush.msra.mxu0 0.0
    %205 = vmatpush.msra.mxu0 0.0
    %206 = vmatpush.msra.mxu0 0.0
    %207 = vmatpush.msra.mxu0 0.0
    %208 = vmatpush.msra.mxu0 %v185
    %209 = vmatpush.msra.mxu0 %v184
    %210 = vmatpush.msra.mxu0 %v183
    %211 = vmatpush.msra.mxu0 %v182
    %212 = vmatmul.f32.gmra.mxu0 %v191
    %v213 = vpop.f32.mrf.mxu0
    %v214 = vadd.f32 %v188, %v213
    %215 = vmatmul.f32.gmra.mxu0 %v194
    %v216 = vpop.f32.mrf.mxu0
    %v217 = vadd.f32 %v188, %v216
    %218 = vdwg.mxu0
    %v219 = vld [vmem:[%s9] sm:$0xff]
    %v220 = vld [vmem:[%s9 + $0x8] sm:$0xff]
    %v221 = vld [vmem:[%s9 + $0x10] sm:$0xff]
    %v222 = vld [vmem:[%s9 + $0x18] sm:$0xff]
    %225 = vrot.lane.b32.xlu0 %v214, 96
    %v226 = vpop.permute.xlu0 %225
    %227 = vrot.lane.b32.xlu0 %v217, 96
    %v228 = vpop.permute.xlu0 %227
    %vm229 = vcmask 130048
    %v230 = vsel %vm229, %v214, 0
    %v232 = vsel %vm229, %v217, 0
    %v234 = vsel %vm229, %v226, 0
    %v236 = vsel %vm229, %v228, 0
    %238 = vmatpush.xpose.msra.mxu0 0.0
    %239 = vmatpush.xpose.msra.mxu0 0.0
    %240 = vmatpush.xpose.msra.mxu0 0.0
    %241 = vmatpush.xpose.msra.mxu0 0.0
    %242 = vmatpush.xpose.msra.mxu0 0.0
    %243 = vmatpush.xpose.msra.mxu0 0.0
    %244 = vmatpush.xpose.msra.mxu0 0.0
    %245 = vmatpush.xpose.msra.mxu0 0.0
    %246 = vmatpush.xpose.msra.mxu0 0.0
    %247 = vmatpush.xpose.msra.mxu0 0.0
    %248 = vmatpush.xpose.msra.mxu0 0.0
    %249 = vmatpush.xpose.msra.mxu0 0.0
    %250 = vmatpush.xpose.msra.mxu0 0.0
    %251 = vmatpush.xpose.msra.mxu0 0.0
    %252 = vmatpush.xpose.msra.mxu0 %v236
    %253 = vmatpush.xpose.msra.mxu0 %v234
    %254 = vmatmul.f32.gmra.mxu0 %v230
    %v255 = vpop.f32.mrf.mxu0
    %v256 = vadd.f32 0.0, %v255
    %257 = vmatmul.f32.gmra.mxu0 %v232
    %v258 = vpop.f32.mrf.mxu0
    %v259 = vadd.f32 0.0, %v258
    %260 = vdwg.mxu0
    %v261 = vmul.f32 %v256, 0.25
    %v262 = vmul.f32 %v259, 0.25
    %v263 = vadd.f32 %v261, %v116
    %v264 = vadd.f32 %v262, %v117
    %v265 = vsel %vm229, %v263, -inf
    %266 = vmax.xlane.f32.xlu0 %v265
    %v267 = vpop.xlane.xlu0 %266
    %v268 = vsel %vm229, %v264, -inf
    %269 = vmax.xlane.f32.xlu0 %v268
    %v270 = vpop.xlane.xlu0 %269
    %v271 = vsub.f32 %v263, %v267
    %v272 = vsub.f32 %v264, %v270
    %v273 = vmul.f32 %v271, 1.442695
    %v274 = vpow.pop %v273
    %v275 = vmul.f32 %v272, 1.442695
    %v276 = vpow.pop %v275
    %v277 = vsel %vm229, %v274, 0.0
    %278 = vadd.xlane.f32.xlu0 %v277
    %v279 = vpop.xlane.xlu0 %278
    %v280 = vsel %vm229, %v276, 0.0
    %281 = vadd.xlane.f32.xlu0 %v280
    %v282 = vpop.xlane.xlu0 %281
    %v283 = vrcp.pop %v279
    %v284 = vrcp.pop %v282
    %v285 = vmul.f32 %v274, %v283
    %v286 = vmul.f32 %v276, %v284
    %287 = vrot.lane.b32.xlu0 %v214, 64
    %v288 = vpop.permute.xlu0 %287
    %289 = vrot.lane.b32.xlu0 %v217, 64
    %v290 = vpop.permute.xlu0 %289
    %v294 = vsel %vm229, %v285, 0
    %v297 = vsel %vm229, %v286, 0
    %299 = vmatpush.msra.mxu0 0.0
    %300 = vmatpush.msra.mxu0 0.0
    %301 = vmatpush.msra.mxu0 0.0
    %302 = vmatpush.msra.mxu0 0.0
    %303 = vmatpush.msra.mxu0 0.0
    %304 = vmatpush.msra.mxu0 0.0
    %305 = vmatpush.msra.mxu0 0.0
    %306 = vmatpush.msra.mxu0 0.0
    %307 = vmatpush.msra.mxu0 0.0
    %308 = vmatpush.msra.mxu0 0.0
    %309 = vmatpush.msra.mxu0 0.0
    %310 = vmatpush.msra.mxu0 0.0
    %311 = vmatpush.msra.mxu0 0.0
    %312 = vmatpush.msra.mxu0 0.0
    %313 = vmatpush.msra.mxu0 %v290
    %314 = vmatpush.msra.mxu0 %v288
    %315 = vmatmul.f32.gmra.mxu0 %v294
    %v316 = vpop.f32.mrf.mxu0
    %v317 = vadd.f32 0.0, %v316
    %318 = vmatmul.f32.gmra.mxu0 %v297
    %v319 = vpop.f32.mrf.mxu0
    %v320 = vadd.f32 0.0, %v319
    %321 = vdwg.mxu0
    %322 = vrot.lane.b32.xlu0 %v214, 112
    %v323 = vpop.permute.xlu0 %322
    %324 = vrot.lane.b32.xlu0 %v217, 112
    %v325 = vpop.permute.xlu0 %324
    %326 = vrot.lane.b32.xlu0 %v214, 80
    %v327 = vpop.permute.xlu0 %326
    %328 = vrot.lane.b32.xlu0 %v217, 80
    %v329 = vpop.permute.xlu0 %328
    %v330 = vsel %vm229, %v323, 0
    %v332 = vsel %vm229, %v325, 0
    %v334 = vsel %vm229, %v327, 0
    %v336 = vsel %vm229, %v329, 0
    %338 = vmatpush.xpose.msra.mxu0 0.0
    %339 = vmatpush.xpose.msra.mxu0 0.0
    %340 = vmatpush.xpose.msra.mxu0 0.0
    %341 = vmatpush.xpose.msra.mxu0 0.0
    %342 = vmatpush.xpose.msra.mxu0 0.0
    %343 = vmatpush.xpose.msra.mxu0 0.0
    %344 = vmatpush.xpose.msra.mxu0 0.0
    %345 = vmatpush.xpose.msra.mxu0 0.0
    %346 = vmatpush.xpose.msra.mxu0 0.0
    %347 = vmatpush.xpose.msra.mxu0 0.0
    %348 = vmatpush.xpose.msra.mxu0 0.0
    %349 = vmatpush.xpose.msra.mxu0 0.0
    %350 = vmatpush.xpose.msra.mxu0 0.0
    %351 = vmatpush.xpose.msra.mxu0 0.0
    %352 = vmatpush.xpose.msra.mxu0 %v336
    %353 = vmatpush.xpose.msra.mxu0 %v334
    %354 = vmatmul.f32.gmra.mxu0 %v330
    %v355 = vpop.f32.mrf.mxu0
    %v356 = vadd.f32 0.0, %v355
    %357 = vmatmul.f32.gmra.mxu0 %v332
    %v358 = vpop.f32.mrf.mxu0
    %v359 = vadd.f32 0.0, %v358
    %360 = vdwg.mxu0
    %v361 = vmul.f32 %v356, 0.25
    %v362 = vmul.f32 %v359, 0.25
    %v363 = vadd.f32 %v361, %v116
    %v364 = vadd.f32 %v362, %v117
    %v365 = vsel %vm229, %v363, -inf
    %366 = vmax.xlane.f32.xlu0 %v365
    %v367 = vpop.xlane.xlu0 %366
    %v368 = vsel %vm229, %v364, -inf
    %369 = vmax.xlane.f32.xlu0 %v368
    %v370 = vpop.xlane.xlu0 %369
    %v371 = vsub.f32 %v363, %v367
    %v372 = vsub.f32 %v364, %v370
    %v373 = vmul.f32 %v371, 1.442695
    %v374 = vpow.pop %v373
    %v375 = vmul.f32 %v372, 1.442695
    %v376 = vpow.pop %v375
    %v377 = vsel %vm229, %v374, 0.0
    %378 = vadd.xlane.f32.xlu0 %v377
    %v379 = vpop.xlane.xlu0 %378
    %v380 = vsel %vm229, %v376, 0.0
    %381 = vadd.xlane.f32.xlu0 %v380
    %v382 = vpop.xlane.xlu0 %381
    %v383 = vrcp.pop %v379
    %v384 = vrcp.pop %v382
    %v385 = vmul.f32 %v374, %v383
    %v386 = vmul.f32 %v376, %v384
    %387 = vrot.lane.b32.xlu0 %v214, 48
    %v388 = vpop.permute.xlu0 %387
    %389 = vrot.lane.b32.xlu0 %v217, 48
    %v390 = vpop.permute.xlu0 %389
    %v394 = vsel %vm229, %v385, 0
    %v397 = vsel %vm229, %v386, 0
    %399 = vmatpush.msra.mxu0 0.0
    %400 = vmatpush.msra.mxu0 0.0
    %401 = vmatpush.msra.mxu0 0.0
    %402 = vmatpush.msra.mxu0 0.0
    %403 = vmatpush.msra.mxu0 0.0
    %404 = vmatpush.msra.mxu0 0.0
    %405 = vmatpush.msra.mxu0 0.0
    %406 = vmatpush.msra.mxu0 0.0
    %407 = vmatpush.msra.mxu0 0.0
    %408 = vmatpush.msra.mxu0 0.0
    %409 = vmatpush.msra.mxu0 0.0
    %410 = vmatpush.msra.mxu0 0.0
    %411 = vmatpush.msra.mxu0 0.0
    %412 = vmatpush.msra.mxu0 0.0
    %413 = vmatpush.msra.mxu0 %v390
    %414 = vmatpush.msra.mxu0 %v388
    %415 = vmatmul.f32.gmra.mxu0 %v394
    %v416 = vpop.f32.mrf.mxu0
    %v417 = vadd.f32 0.0, %v416
    %418 = vmatmul.f32.gmra.mxu0 %v397
    %v419 = vpop.f32.mrf.mxu0
    %v420 = vadd.f32 0.0, %v419
    %421 = vdwg.mxu0
    %v423 = vsel %vm229, %v417, 0
    %v426 = vsel %vm229, %v420, 0
    %428 = vmatpush.msra.mxu0 0.0
    %429 = vmatpush.msra.mxu0 0.0
    %430 = vmatpush.msra.mxu0 0.0
    %431 = vmatpush.msra.mxu0 0.0
    %432 = vmatpush.msra.mxu0 0.0
    %433 = vmatpush.msra.mxu0 0.0
    %434 = vmatpush.msra.mxu0 0.0
    %435 = vmatpush.msra.mxu0 0.0
    %436 = vmatpush.msra.mxu0 0.0
    %437 = vmatpush.msra.mxu0 0.0
    %438 = vmatpush.msra.mxu0 0.0
    %439 = vmatpush.msra.mxu0 0.0
    %440 = vmatpush.msra.mxu0 0.0
    %441 = vmatpush.msra.mxu0 0.0
    %442 = vmatpush.msra.mxu0 %v222
    %443 = vmatpush.msra.mxu0 %v221
    %444 = vmatmul.f32.gmra.mxu0 %v423
    %v445 = vpop.f32.mrf.mxu0
    %v446 = vadd.f32 0.0, %v445
    %447 = vmatmul.f32.gmra.mxu0 %v426
    %v448 = vpop.f32.mrf.mxu0
    %v449 = vadd.f32 0.0, %v448
    %450 = vdwg.mxu0
    %v452 = vsel %vm229, %v317, 0
    %v455 = vsel %vm229, %v320, 0
    %457 = vmatpush.msra.mxu0 0.0
    %458 = vmatpush.msra.mxu0 0.0
    %459 = vmatpush.msra.mxu0 0.0
    %460 = vmatpush.msra.mxu0 0.0
    %461 = vmatpush.msra.mxu0 0.0
    %462 = vmatpush.msra.mxu0 0.0
    %463 = vmatpush.msra.mxu0 0.0
    %464 = vmatpush.msra.mxu0 0.0
    %465 = vmatpush.msra.mxu0 0.0
    %466 = vmatpush.msra.mxu0 0.0
    %467 = vmatpush.msra.mxu0 0.0
    %468 = vmatpush.msra.mxu0 0.0
    %469 = vmatpush.msra.mxu0 0.0
    %470 = vmatpush.msra.mxu0 0.0
    %471 = vmatpush.msra.mxu0 %v220
    %472 = vmatpush.msra.mxu0 %v219
    %473 = vmatmul.f32.gmra.mxu0 %v452
    %v474 = vpop.f32.mrf.mxu0
    %v475 = vadd.f32 %v446, %v474
    %476 = vmatmul.f32.gmra.mxu0 %v455
    %v477 = vpop.f32.mrf.mxu0
    %v478 = vadd.f32 %v449, %v477
    %479 = vdwg.mxu0
    %v480 = vadd.f32 %v114, %v475
    %v481 = vadd.f32 %v115, %v478
    %v482 = vld [vmem:[%s10] sm:$0x1]
    %v484 = vperm.slane %v482, 0
    %v486 = vadd.f32 %v480, %v484
    %v487 = vadd.f32 %v481, %v484
    %v488 = vld [vmem:[%s11] sm:$0x1]
    %v489 = vld [vmem:[%s12] sm:$0x1]
    %v490 = vsel %vm120, %v486, 0.0
    %491 = vadd.xlane.f32.xlu0 %v490
    %v492 = vpop.xlane.xlu0 %491
    %v493 = vsel %vm120, %v487, 0.0
    %494 = vadd.xlane.f32.xlu0 %v493
    %v495 = vpop.xlane.xlu0 %494
    %v496 = vmul.f32 %v492, %v133
    %v497 = vmul.f32 %v495, %v133
    %v498 = vsub.f32 %v486, %v496
    %v499 = vsub.f32 %v487, %v497
    %v500 = vmul.f32 %v498, %v498
    %v501 = vmul.f32 %v499, %v499
    %v502 = vsel %vm120, %v500, 0.0
    %503 = vadd.xlane.f32.xlu0 %v502
    %v504 = vpop.xlane.xlu0 %503
    %v505 = vsel %vm120, %v501, 0.0
    %506 = vadd.xlane.f32.xlu0 %v505
    %v507 = vpop.xlane.xlu0 %506
    %v508 = vmul.f32 %v504, %v133
    %v509 = vmul.f32 %v507, %v133
    %v510 = vadd.f32 %v508, 1e-05
    %v511 = vadd.f32 %v509, 1e-05
    %v512 = vrsqrt.pop %v510
    %v513 = vmul.f32 %v512, %v510
    %v514 = vmul.f32 %v513, %v512
    %v515 = vmul.f32 0.5, %v514
    %v516 = vsub.f32 1.5, %v515
    %v517 = vmul.f32 %v512, %v516
    %vm518 = vweird.f32 %v510
    %vm519 = vweird.f32 %v512
    %vm520 = vmor %vm518, %vm519
    %v521 = vsel %vm520, %v512, %v517
    %v522 = vrsqrt.pop %v511
    %v523 = vmul.f32 %v522, %v511
    %v524 = vmul.f32 %v523, %v522
    %v525 = vmul.f32 0.5, %v524
    %v526 = vsub.f32 1.5, %v525
    %v527 = vmul.f32 %v522, %v526
    %vm528 = vweird.f32 %v511
    %vm529 = vweird.f32 %v522
    %vm530 = vmor %vm528, %vm529
    %v531 = vsel %vm530, %v522, %v527
    %v532 = vmul.f32 %v498, %v521
    %v533 = vmul.f32 %v499, %v531
    %v535 = vperm.slane %v488, 0
    %v537 = vmul.f32 %v532, %v535
    %v538 = vmul.f32 %v533, %v535
    %v540 = vperm.slane %v489, 0
    %v542 = vadd.f32 %v537, %v540
    %v543 = vadd.f32 %v538, %v540
    %v544 = vld [vmem:[%s13] sm:$0xff]
    %v545 = vld [vmem:[%s13 + $0x8] sm:$0xff]
    %v546 = vld [vmem:[%s13 + $0x10] sm:$0xff]
    %v547 = vld [vmem:[%s13 + $0x18] sm:$0xff]
    %v548 = vld [vmem:[%s14] sm:$0x1]
    %v550 = vperm.slane %v548, 0
    %v553 = vsel %vm120, %v542, 0
    %v556 = vsel %vm120, %v543, 0
    %558 = vmatpush.msra.mxu0 0.0
    %559 = vmatpush.msra.mxu0 0.0
    %560 = vmatpush.msra.mxu0 0.0
    %561 = vmatpush.msra.mxu0 0.0
    %562 = vmatpush.msra.mxu0 0.0
    %563 = vmatpush.msra.mxu0 0.0
    %564 = vmatpush.msra.mxu0 0.0
    %565 = vmatpush.msra.mxu0 0.0
    %566 = vmatpush.msra.mxu0 0.0
    %567 = vmatpush.msra.mxu0 0.0
    %568 = vmatpush.msra.mxu0 0.0
    %569 = vmatpush.msra.mxu0 0.0
    %570 = vmatpush.msra.mxu0 %v547
    %571 = vmatpush.msra.mxu0 %v546
    %572 = vmatpush.msra.mxu0 %v545
    %573 = vmatpush.msra.mxu0 %v544
    %574 = vmatmul.f32.gmra.mxu0 %v553
    %v575 = vpop.f32.mrf.mxu0
    %v576 = vadd.f32 %v550, %v575
    %577 = vmatmul.f32.gmra.mxu0 %v556
    %v578 = vpop.f32.mrf.mxu0
    %v579 = vadd.f32 %v550, %v578
    %580 = vdwg.mxu0
    %v581 = vmul.f32 %v576, 0.5
    %v582 = vmul.f32 %v579, 0.5
    %v583 = vmul.f32 %v576, 0.044715
    %v584 = vmul.f32 %v579, 0.044715
    %v585 = vmul.f32 %v583, %v576
    %v586 = vmul.f32 %v584, %v579
    %v587 = vmul.f32 %v585, %v576
    %v588 = vmul.f32 %v586, %v579
    %v589 = vadd.f32 %v576, %v587
    %v590 = vadd.f32 %v579, %v588
    %v591 = vmul.f32 %v589, 0.7978846
    %v592 = vmul.f32 %v590, 0.7978846
    %v593 = vtanh.pop %v591
    %v594 = vtanh.pop %v592
    %v595 = vadd.f32 %v593, 1.0
    %v596 = vadd.f32 %v594, 1.0
    %v597 = vmul.f32 %v581, %v595
    %v598 = vmul.f32 %v582, %v596
    %v599 = vld [vmem:[%s15] sm:$0xff]
    %v600 = vld [vmem:[%s15 + $0x8] sm:$0xff]
    %v601 = vld [vmem:[%s15 + $0x10] sm:$0xff]
    %v602 = vld [vmem:[%s15 + $0x18] sm:$0xff]
    %v603 = vld [vmem:[%s15 + $0x20] sm:$0xff]
    %v604 = vld [vmem:[%s15 + $0x28] sm:$0xff]
    %v605 = vld [vmem:[%s15 + $0x30] sm:$0xff]
    %v606 = vld [vmem:[%s15 + $0x38] sm:$0xff]
    %v607 = vld [vmem:[%s15 + $0x40] sm:$0xff]
    %v608 = vld [vmem:[%s15 + $0x48] sm:$0xff]
    %v609 = vld [vmem:[%s15 + $0x50] sm:$0xff]
    %v610 = vld [vmem:[%s15 + $0x58] sm:$0xff]
    %v611 = vld [vmem:[%s15 + $0x60] sm:$0xff]
    %v612 = vld [vmem:[%s15 + $0x68] sm:$0xff]
    %v613 = vld [vmem:[%s15 + $0x70] sm:$0xff]
    %v614 = vld [vmem:[%s15 + $0x78] sm:$0xff]
    %615 = vmatpush.msra.mxu0 %v614
    %616 = vmatpush.msra.mxu0 %v613
    %617 = vmatpush.msra.mxu0 %v612
    %618 = vmatpush.msra.mxu0 %v611
    %619 = vmatpush.msra.mxu0 %v610
    %620 = vmatpush.msra.mxu0 %v609
    %621 = vmatpush.msra.mxu0 %v608
    %622 = vmatpush.msra.mxu0 %v607
    %623 = vmatpush.msra.mxu0 %v606
    %624 = vmatpush.msra.mxu0 %v605
    %625 = vmatpush.msra.mxu0 %v604
    %626 = vmatpush.msra.mxu0 %v603
    %627 = vmatpush.msra.mxu0 %v602
    %628 = vmatpush.msra.mxu0 %v601
    %629 = vmatpush.msra.mxu0 %v600
    %630 = vmatpush.msra.mxu0 %v599
    %631 = vmatmul.f32.gmra.mxu0 %v597
    %v632 = vpop.f32.mrf.mxu0
    %v633 = vadd.f32 0.0, %v632
    %634 = vmatmul.f32.gmra.mxu0 %v598
    %v635 = vpop.f32.mrf.mxu0
    %v636 = vadd.f32 0.0, %v635
    %637 = vdwg.mxu0
    %v638 = vadd.f32 %v486, %v633
    %v639 = vadd.f32 %v487, %v636
    %v640 = vld [vmem:[%s16] sm:$0x1]
    %v642 = vperm.slane %v640, 0
    %v644 = vadd.f32 %v638, %v642
    %v645 = vadd.f32 %v639, %v642
    %s646 = scalar_lea.vmem %s5, 1
    %v647 = vld [vmem:[%s646] sm:$0x1]
    %s648 = scalar_lea.vmem %s6, 1
    %v649 = vld [vmem:[%s648] sm:$0x1]
    %v650 = vsel %vm120, %v644, 0.0
    %651 = vadd.xlane.f32.xlu0 %v650
    %v652 = vpop.xlane.xlu0 %651
    %v653 = vsel %vm120, %v645, 0.0
    %654 = vadd.xlane.f32.xlu0 %v653
    %v655 = vpop.xlane.xlu0 %654
    %v656 = vmul.f32 %v652, %v133
    %v657 = vmul.f32 %v655, %v133
    %v658 = vsub.f32 %v644, %v656
    %v659 = vsub.f32 %v645, %v657
    %v660 = vmul.f32 %v658, %v658
    %v661 = vmul.f32 %v659, %v659
    %v662 = vsel %vm120, %v660, 0.0
    %663 = vadd.xlane.f32.xlu0 %v662
    %v664 = vpop.xlane.xlu0 %663
    %v665 = vsel %vm120, %v661, 0.0
    %666 = vadd.xlane.f32.xlu0 %v665
    %v667 = vpop.xlane.xlu0 %666
    %v668 = vmul.f32 %v664, %v133
    %v669 = vmul.f32 %v667, %v133
    %v670 = vadd.f32 %v668, 1e-05
    %v671 = vadd.f32 %v669, 1e-05
    %v672 = vrsqrt.pop %v670
    %v673 = vmul.f32 %v672, %v670
    %v674 = vmul.f32 %v673, %v672
    %v675 = vmul.f32 0.5, %v674
    %v676 = vsub.f32 1.5, %v675
    %v677 = vmul.f32 %v672, %v676
    %vm678 = vweird.f32 %v670
    %vm679 = vweird.f32 %v672
    %vm680 = vmor %vm678, %vm679
    %v681 = vsel %vm680, %v672, %v677
    %v682 = vrsqrt.pop %v671
    %v683 = vmul.f32 %v682, %v671
    %v684 = vmul.f32 %v683, %v682
    %v685 = vmul.f32 0.5, %v684
    %v686 = vsub.f32 1.5, %v685
    %v687 = vmul.f32 %v682, %v686
    %vm688 = vweird.f32 %v671
    %vm689 = vweird.f32 %v682
    %vm690 = vmor %vm688, %vm689
    %v691 = vsel %vm690, %v682, %v687
    %v692 = vmul.f32 %v658, %v681
    %v693 = vmul.f32 %v659, %v691
    %v695 = vperm.slane %v647, 0
    %v697 = vmul.f32 %v692, %v695
    %v698 = vmul.f32 %v693, %v695
    %v700 = vperm.slane %v649, 0
    %v702 = vadd.f32 %v697, %v700
    %v703 = vadd.f32 %v698, %v700
    %s704 = scalar_lea.vmem %s7, 32
    %v705 = vld [vmem:[%s704] sm:$0xff]
    %v706 = vld [vmem:[%s704 + $0x8] sm:$0xff]
    %v707 = vld [vmem:[%s704 + $0x10] sm:$0xff]
    %v708 = vld [vmem:[%s704 + $0x18] sm:$0xff]
    %s709 = scalar_lea.vmem %s8, 1
    %v710 = vld [vmem:[%s709] sm:$0x1]
    %v712 = vperm.slane %v710, 0
    %v715 = vsel %vm120, %v702, 0
    %v718 = vsel %vm120, %v703, 0
    %720 = vmatpush.msra.mxu0 0.0
    %721 = vmatpush.msra.mxu0 0.0
    %722 = vmatpush.msra.mxu0 0.0
    %723 = vmatpush.msra.mxu0 0.0
    %724 = vmatpush.msra.mxu0 0.0
    %725 = vmatpush.msra.mxu0 0.0
    %726 = vmatpush.msra.mxu0 0.0
    %727 = vmatpush.msra.mxu0 0.0
    %728 = vmatpush.msra.mxu0 0.0
    %729 = vmatpush.msra.mxu0 0.0
    %730 = vmatpush.msra.mxu0 0.0
    %731 = vmatpush.msra.mxu0 0.0
    %732 = vmatpush.msra.mxu0 %v708
    %733 = vmatpush.msra.mxu0 %v707
    %734 = vmatpush.msra.mxu0 %v706
    %735 = vmatpush.msra.mxu0 %v705
    %736 = vmatmul.f32.gmra.mxu0 %v715
    %v737 = vpop.f32.mrf.mxu0
    %v738 = vadd.f32 %v712, %v737
    %739 = vmatmul.f32.gmra.mxu0 %v718
    %v740 = vpop.f32.mrf.mxu0
    %v741 = vadd.f32 %v712, %v740
    %742 = vdwg.mxu0
    %s743 = scalar_lea.vmem %s9, 32
    %v744 = vld [vmem:[%s743] sm:$0xff]
    %v745 = vld [vmem:[%s743 + $0x8] sm:$0xff]
    %v746 = vld [vmem:[%s743 + $0x10] sm:$0xff]
    %v747 = vld [vmem:[%s743 + $0x18] sm:$0xff]
    %750 = vrot.lane.b32.xlu0 %v738, 96
    %v751 = vpop.permute.xlu0 %750
    %752 = vrot.lane.b32.xlu0 %v741, 96
    %v753 = vpop.permute.xlu0 %752
    %v754 = vsel %vm229, %v738, 0
    %v756 = vsel %vm229, %v741, 0
    %v758 = vsel %vm229, %v751, 0
    %v760 = vsel %vm229, %v753, 0
    %762 = vmatpush.xpose.msra.mxu0 0.0
    %763 = vmatpush.xpose.msra.mxu0 0.0
    %764 = vmatpush.xpose.msra.mxu0 0.0
    %765 = vmatpush.xpose.msra.mxu0 0.0
    %766 = vmatpush.xpose.msra.mxu0 0.0
    %767 = vmatpush.xpose.msra.mxu0 0.0
    %768 = vmatpush.xpose.msra.mxu0 0.0
    %769 = vmatpush.xpose.msra.mxu0 0.0
    %770 = vmatpush.xpose.msra.mxu0 0.0
    %771 = vmatpush.xpose.msra.mxu0 0.0
    %772 = vmatpush.xpose.msra.mxu0 0.0
    %773 = vmatpush.xpose.msra.mxu0 0.0
    %774 = vmatpush.xpose.msra.mxu0 0.0
    %775 = vmatpush.xpose.msra.mxu0 0.0
    %776 = vmatpush.xpose.msra.mxu0 %v760
    %777 = vmatpush.xpose.msra.mxu0 %v758
    %778 = vmatmul.f32.gmra.mxu0 %v754
    %v779 = vpop.f32.mrf.mxu0
    %v780 = vadd.f32 0.0, %v779
    %781 = vmatmul.f32.gmra.mxu0 %v756
    %v782 = vpop.f32.mrf.mxu0
    %v783 = vadd.f32 0.0, %v782
    %784 = vdwg.mxu0
    %v785 = vmul.f32 %v780, 0.25
    %v786 = vmul.f32 %v783, 0.25
    %v787 = vadd.f32 %v785, %v116
    %v788 = vadd.f32 %v786, %v117
    %v789 = vsel %vm229, %v787, -inf
    %790 = vmax.xlane.f32.xlu0 %v789
    %v791 = vpop.xlane.xlu0 %790
    %v792 = vsel %vm229, %v788, -inf
    %793 = vmax.xlane.f32.xlu0 %v792
    %v794 = vpop.xlane.xlu0 %793
    %v795 = vsub.f32 %v787, %v791
    %v796 = vsub.f32 %v788, %v794
    %v797 = vmul.f32 %v795, 1.442695
    %v798 = vpow.pop %v797
    %v799 = vmul.f32 %v796, 1.442695
    %v800 = vpow.pop %v799
    %v801 = vsel %vm229, %v798, 0.0
    %802 = vadd.xlane.f32.xlu0 %v801
    %v803 = vpop.xlane.xlu0 %802
    %v804 = vsel %vm229, %v800, 0.0
    %805 = vadd.xlane.f32.xlu0 %v804
    %v806 = vpop.xlane.xlu0 %805
    %v807 = vrcp.pop %v803
    %v808 = vrcp.pop %v806
    %v809 = vmul.f32 %v798, %v807
    %v810 = vmul.f32 %v800, %v808
    %811 = vrot.lane.b32.xlu0 %v738, 64
    %v812 = vpop.permute.xlu0 %811
    %813 = vrot.lane.b32.xlu0 %v741, 64
    %v814 = vpop.permute.xlu0 %813
    %v818 = vsel %vm229, %v809, 0
    %v821 = vsel %vm229, %v810, 0
    %823 = vmatpush.msra.mxu0 0.0
    %824 = vmatpush.msra.mxu0 0.0
    %825 = vmatpush.msra.mxu0 0.0
    %826 = vmatpush.msra.mxu0 0.0
    %827 = vmatpush.msra.mxu0 0.0
    %828 = vmatpush.msra.mxu0 0.0
    %829 = vmatpush.msra.mxu0 0.0
    %830 = vmatpush.msra.mxu0 0.0
    %831 = vmatpush.msra.mxu0 0.0
    %832 = vmatpush.msra.mxu0 0.0
    %833 = vmatpush.msra.mxu0 0.0
    %834 = vmatpush.msra.mxu0 0.0
    %835 = vmatpush.msra.mxu0 0.0
    %836 = vmatpush.msra.mxu0 0.0
    %837 = vmatpush.msra.mxu0 %v814
    %838 = vmatpush.msra.mxu0 %v812
    %839 = vmatmul.f32.gmra.mxu0 %v818
    %v840 = vpop.f32.mrf.mxu0
    %v841 = vadd.f32 0.0, %v840
    %842 = vmatmul.f32.gmra.mxu0 %v821
    %v843 = vpop.f32.mrf.mxu0
    %v844 = vadd.f32 0.0, %v843
    %845 = vdwg.mxu0
    %846 = vrot.lane.b32.xlu0 %v738, 112
    %v847 = vpop.permute.xlu0 %846
    %848 = vrot.lane.b32.xlu0 %v741, 112
    %v849 = vpop.permute.xlu0 %848
    %850 = vrot.lane.b32.xlu0 %v738, 80
    %v851 = vpop.permute.xlu0 %850
    %852 = vrot.lane.b32.xlu0 %v741, 80
    %v853 = vpop.permute.xlu0 %852
    %v854 = vsel %vm229, %v847, 0
    %v856 = vsel %vm229, %v849, 0
    %v858 = vsel %vm229, %v851, 0
    %v860 = vsel %vm229, %v853, 0
    %862 = vmatpush.xpose.msra.mxu0 0.0
    %863 = vmatpush.xpose.msra.mxu0 0.0
    %864 = vmatpush.xpose.msra.mxu0 0.0
    %865 = vmatpush.xpose.msra.mxu0 0.0
    %866 = vmatpush.xpose.msra.mxu0 0.0
    %867 = vmatpush.xpose.msra.mxu0 0.0
    %868 = vmatpush.xpose.msra.mxu0 0.0
    %869 = vmatpush.xpose.msra.mxu0 0.0
    %870 = vmatpush.xpose.msra.mxu0 0.0
    %871 = vmatpush.xpose.msra.mxu0 0.0
    %872 = vmatpush.xpose.msra.mxu0 0.0
    %873 = vmatpush.xpose.msra.mxu0 0.0
    %874 = vmatpush.xpose.msra.mxu0 0.0
    %875 = vmatpush.xpose.msra.mxu0 0.0
    %876 = vmatpush.xpose.msra.mxu0 %v860
    %877 = vmatpush.xpose.msra.mxu0 %v858
    %878 = vmatmul.f32.gmra.mxu0 %v854
    %v879 = vpop.f32.mrf.mxu0
    %v880 = vadd.f32 0.0, %v879
    %881 = vmatmul.f32.gmra.mxu0 %v856
    %v882 = vpop.f32.mrf.mxu0
    %v883 = vadd.f32 0.0, %v882
    %884 = vdwg.mxu0
    %v885 = vmul.f32 %v880, 0.25
    %v886 = vmul.f32 %v883, 0.25
    %v887 = vadd.f32 %v885, %v116
    %v888 = vadd.f32 %v886, %v117
    %v889 = vsel %vm229, %v887, -inf
    %890 = vmax.xlane.f32.xlu0 %v889
    %v891 = vpop.xlane.xlu0 %890
    %v892 = vsel %vm229, %v888, -inf
    %893 = vmax.xlane.f32.xlu0 %v892
    %v894 = vpop.xlane.xlu0 %893
    %v895 = vsub.f32 %v887, %v891
    %v896 = vsub.f32 %v888, %v894
    %v897 = vmul.f32 %v895, 1.442695
    %v898 = vpow.pop %v897
    %v899 = vmul.f32 %v896, 1.442695
    %v900 = vpow.pop %v899
    %v901 = vsel %vm229, %v898, 0.0
    %902 = vadd.xlane.f32.xlu0 %v901
    %v903 = vpop.xlane.xlu0 %902
    %v904 = vsel %vm229, %v900, 0.0
    %905 = vadd.xlane.f32.xlu0 %v904
    %v906 = vpop.xlane.xlu0 %905
    %v907 = vrcp.pop %v903
    %v908 = vrcp.pop %v906
    %v909 = vmul.f32 %v898, %v907
    %v910 = vmul.f32 %v900, %v908
    %911 = vrot.lane.b32.xlu0 %v738, 48
    %v912 = vpop.permute.xlu0 %911
    %913 = vrot.lane.b32.xlu0 %v741, 48
    %v914 = vpop.permute.xlu0 %913
    %v918 = vsel %vm229, %v909, 0
    %v921 = vsel %vm229, %v910, 0
    %923 = vmatpush.msra.mxu0 0.0
    %924 = vmatpush.msra.mxu0 0.0
    %925 = vmatpush.msra.mxu0 0.0
    %926 = vmatpush.msra.mxu0 0.0
    %927 = vmatpush.msra.mxu0 0.0
    %928 = vmatpush.msra.mxu0 0.0
    %929 = vmatpush.msra.mxu0 0.0
    %930 = vmatpush.msra.mxu0 0.0
    %931 = vmatpush.msra.mxu0 0.0
    %932 = vmatpush.msra.mxu0 0.0
    %933 = vmatpush.msra.mxu0 0.0
    %934 = vmatpush.msra.mxu0 0.0
    %935 = vmatpush.msra.mxu0 0.0
    %936 = vmatpush.msra.mxu0 0.0
    %937 = vmatpush.msra.mxu0 %v914
    %938 = vmatpush.msra.mxu0 %v912
    %939 = vmatmul.f32.gmra.mxu0 %v918
    %v940 = vpop.f32.mrf.mxu0
    %v941 = vadd.f32 0.0, %v940
    %942 = vmatmul.f32.gmra.mxu0 %v921
    %v943 = vpop.f32.mrf.mxu0
    %v944 = vadd.f32 0.0, %v943
    %945 = vdwg.mxu0
    %v947 = vsel %vm229, %v941, 0
    %v950 = vsel %vm229, %v944, 0
    %952 = vmatpush.msra.mxu0 0.0
    %953 = vmatpush.msra.mxu0 0.0
    %954 = vmatpush.msra.mxu0 0.0
    %955 = vmatpush.msra.mxu0 0.0
    %956 = vmatpush.msra.mxu0 0.0
    %957 = vmatpush.msra.mxu0 0.0
    %958 = vmatpush.msra.mxu0 0.0
    %959 = vmatpush.msra.mxu0 0.0
    %960 = vmatpush.msra.mxu0 0.0
    %961 = vmatpush.msra.mxu0 0.0
    %962 = vmatpush.msra.mxu0 0.0
    %963 = vmatpush.msra.mxu0 0.0
    %964 = vmatpush.msra.mxu0 0.0
    %965 = vmatpush.msra.mxu0 0.0
    %966 = vmatpush.msra.mxu0 %v747
    %967 = vmatpush.msra.mxu0 %v746
    %968 = vmatmul.f32.gmra.mxu0 %v947
    %v969 = vpop.f32.mrf.mxu0
    %v970 = vadd.f32 0.0, %v969
    %971 = vmatmul.f32.gmra.mxu0 %v950
    %v972 = vpop.f32.mrf.mxu0
    %v973 = vadd.f32 0.0, %v972
    %974 = vdwg.mxu0
    %v976 = vsel %vm229, %v841, 0
    %v979 = vsel %vm229, %v844, 0
    %981 = vmatpush.msra.mxu0 0.0
    %982 = vmatpush.msra.mxu0 0.0
    %983 = vmatpush.msra.mxu0 0.0
    %984 = vmatpush.msra.mxu0 0.0
    %985 = vmatpush.msra.mxu0 0.0
    %986 = vmatpush.msra.mxu0 0.0
    %987 = vmatpush.msra.mxu0 0.0
    %988 = vmatpush.msra.mxu0 0.0
    %989 = vmatpush.msra.mxu0 0.0
    %990 = vmatpush.msra.mxu0 0.0
    %991 = vmatpush.msra.mxu0 0.0
    %992 = vmatpush.msra.mxu0 0.0
    %993 = vmatpush.msra.mxu0 0.0
    %994 = vmatpush.msra.mxu0 0.0
    %995 = vmatpush.msra.mxu0 %v745
    %996 = vmatpush.msra.mxu0 %v744
    %997 = vmatmul.f32.gmra.mxu0 %v976
    %v998 = vpop.f32.mrf.mxu0
    %v999 = vadd.f32 %v970, %v998
    %1000 = vmatmul.f32.gmra.mxu0 %v979
    %v1001 = vpop.f32.mrf.mxu0
    %v1002 = vadd.f32 %v973, %v1001
    %1003 = vdwg.mxu0
    %v1004 = vadd.f32 %v644, %v999
    %v1005 = vadd.f32 %v645, %v1002
    %s1006 = scalar_lea.vmem %s10, 1
    %v1007 = vld [vmem:[%s1006] sm:$0x1]
    %v1009 = vperm.slane %v1007, 0
    %v1011 = vadd.f32 %v1004, %v1009
    %v1012 = vadd.f32 %v1005, %v1009
    %s1013 = scalar_lea.vmem %s11, 1
    %v1014 = vld [vmem:[%s1013] sm:$0x1]
    %s1015 = scalar_lea.vmem %s12, 1
    %v1016 = vld [vmem:[%s1015] sm:$0x1]
    %v1017 = vsel %vm120, %v1011, 0.0
    %1018 = vadd.xlane.f32.xlu0 %v1017
    %v1019 = vpop.xlane.xlu0 %1018
    %v1020 = vsel %vm120, %v1012, 0.0
    %1021 = vadd.xlane.f32.xlu0 %v1020
    %v1022 = vpop.xlane.xlu0 %1021
    %v1023 = vmul.f32 %v1019, %v133
    %v1024 = vmul.f32 %v1022, %v133
    %v1025 = vsub.f32 %v1011, %v1023
    %v1026 = vsub.f32 %v1012, %v1024
    %v1027 = vmul.f32 %v1025, %v1025
    %v1028 = vmul.f32 %v1026, %v1026
    %v1029 = vsel %vm120, %v1027, 0.0
    %1030 = vadd.xlane.f32.xlu0 %v1029
    %v1031 = vpop.xlane.xlu0 %1030
    %v1032 = vsel %vm120, %v1028, 0.0
    %1033 = vadd.xlane.f32.xlu0 %v1032
    %v1034 = vpop.xlane.xlu0 %1033
    %v1035 = vmul.f32 %v1031, %v133
    %v1036 = vmul.f32 %v1034, %v133
    %v1037 = vadd.f32 %v1035, 1e-05
    %v1038 = vadd.f32 %v1036, 1e-05
    %v1039 = vrsqrt.pop %v1037
    %v1040 = vmul.f32 %v1039, %v1037
    %v1041 = vmul.f32 %v1040, %v1039
    %v1042 = vmul.f32 0.5, %v1041
    %v1043 = vsub.f32 1.5, %v1042
    %v1044 = vmul.f32 %v1039, %v1043
    %vm1045 = vweird.f32 %v1037
    %vm1046 = vweird.f32 %v1039
    %vm1047 = vmor %vm1045, %vm1046
    %v1048 = vsel %vm1047, %v1039, %v1044
    %v1049 = vrsqrt.pop %v1038
    %v1050 = vmul.f32 %v1049, %v1038
    %v1051 = vmul.f32 %v1050, %v1049
    %v1052 = vmul.f32 0.5, %v1051
    %v1053 = vsub.f32 1.5, %v1052
    %v1054 = vmul.f32 %v1049, %v1053
    %vm1055 = vweird.f32 %v1038
    %vm1056 = vweird.f32 %v1049
    %vm1057 = vmor %vm1055, %vm1056
    %v1058 = vsel %vm1057, %v1049, %v1054
    %v1059 = vmul.f32 %v1025, %v1048
    %v1060 = vmul.f32 %v1026, %v1058
    %v1062 = vperm.slane %v1014, 0
    %v1064 = vmul.f32 %v1059, %v1062
    %v1065 = vmul.f32 %v1060, %v1062
    %v1067 = vperm.slane %v1016, 0
    %v1069 = vadd.f32 %v1064, %v1067
    %v1070 = vadd.f32 %v1065, %v1067
    %s1071 = scalar_lea.vmem %s13, 32
    %v1072 = vld [vmem:[%s1071] sm:$0xff]
    %v1073 = vld [vmem:[%s1071 + $0x8] sm:$0xff]
    %v1074 = vld [vmem:[%s1071 + $0x10] sm:$0xff]
    %v1075 = vld [vmem:[%s1071 + $0x18] sm:$0xff]
    %s1076 = scalar_lea.vmem %s14, 1
    %v1077 = vld [vmem:[%s1076] sm:$0x1]
    %v1079 = vperm.slane %v1077, 0
    %v1082 = vsel %vm120, %v1069, 0
    %v1085 = vsel %vm120, %v1070, 0
    %1087 = vmatpush.msra.mxu0 0.0
    %1088 = vmatpush.msra.mxu0 0.0
    %1089 = vmatpush.msra.mxu0 0.0
    %1090 = vmatpush.msra.mxu0 0.0
    %1091 = vmatpush.msra.mxu0 0.0
    %1092 = vmatpush.msra.mxu0 0.0
    %1093 = vmatpush.msra.mxu0 0.0
    %1094 = vmatpush.msra.mxu0 0.0
    %1095 = vmatpush.msra.mxu0 0.0
    %1096 = vmatpush.msra.mxu0 0.0
    %1097 = vmatpush.msra.mxu0 0.0
    %1098 = vmatpush.msra.mxu0 0.0
    %1099 = vmatpush.msra.mxu0 %v1075
    %1100 = vmatpush.msra.mxu0 %v1074
    %1101 = vmatpush.msra.mxu0 %v1073
    %1102 = vmatpush.msra.mxu0 %v1072
    %1103 = vmatmul.f32.gmra.mxu0 %v1082
    %v1104 = vpop.f32.mrf.mxu0
    %v1105 = vadd.f32 %v1079, %v1104
    %1106 = vmatmul.f32.gmra.mxu0 %v1085
    %v1107 = vpop.f32.mrf.mxu0
    %v1108 = vadd.f32 %v1079, %v1107
    %1109 = vdwg.mxu0
    %v1110 = vmul.f32 %v1105, 0.5
    %v1111 = vmul.f32 %v1108, 0.5
    %v1112 = vmul.f32 %v1105, 0.044715
    %v1113 = vmul.f32 %v1108, 0.044715
    %v1114 = vmul.f32 %v1112, %v1105
    %v1115 = vmul.f32 %v1113, %v1108
    %v1116 = vmul.f32 %v1114, %v1105
    %v1117 = vmul.f32 %v1115, %v1108
    %v1118 = vadd.f32 %v1105, %v1116
    %v1119 = vadd.f32 %v1108, %v1117
    %v1120 = vmul.f32 %v1118, 0.7978846
    %v1121 = vmul.f32 %v1119, 0.7978846
    %v1122 = vtanh.pop %v1120
    %v1123 = vtanh.pop %v1121
    %v1124 = vadd.f32 %v1122, 1.0
    %v1125 = vadd.f32 %v1123, 1.0
    %v1126 = vmul.f32 %v1110, %v1124
    %v1127 = vmul.f32 %v1111, %v1125
    %s1128 = scalar_lea.vmem %s15, 128
    %v1129 = vld [vmem:[%s1128] sm:$0xff]
    %v1130 = vld [vmem:[%s1128 + $0x8] sm:$0xff]
    %v1131 = vld [vmem:[%s1128 + $0x10] sm:$0xff]
    %v1132 = vld [vmem:[%s1128 + $0x18] sm:$0xff]
    %v1133 = vld [vmem:[%s1128 + $0x20] sm:$0xff]
    %v1134 = vld [vmem:[%s1128 + $0x28] sm:$0xff]
    %v1135 = vld [vmem:[%s1128 + $0x30] sm:$0xff]
    %v1136 = vld [vmem:[%s1128 + $0x38] sm:$0xff]
    %v1137 = vld [vmem:[%s1128 + $0x40] sm:$0xff]
    %v1138 = vld [vmem:[%s1128 + $0x48] sm:$0xff]
    %v1139 = vld [vmem:[%s1128 + $0x50] sm:$0xff]
    %v1140 = vld [vmem:[%s1128 + $0x58] sm:$0xff]
    %v1141 = vld [vmem:[%s1128 + $0x60] sm:$0xff]
    %v1142 = vld [vmem:[%s1128 + $0x68] sm:$0xff]
    %v1143 = vld [vmem:[%s1128 + $0x70] sm:$0xff]
    %v1144 = vld [vmem:[%s1128 + $0x78] sm:$0xff]
    %1145 = vmatpush.msra.mxu0 %v1144
    %1146 = vmatpush.msra.mxu0 %v1143
    %1147 = vmatpush.msra.mxu0 %v1142
    %1148 = vmatpush.msra.mxu0 %v1141
    %1149 = vmatpush.msra.mxu0 %v1140
    %1150 = vmatpush.msra.mxu0 %v1139
    %1151 = vmatpush.msra.mxu0 %v1138
    %1152 = vmatpush.msra.mxu0 %v1137
    %1153 = vmatpush.msra.mxu0 %v1136
    %1154 = vmatpush.msra.mxu0 %v1135
    %1155 = vmatpush.msra.mxu0 %v1134
    %1156 = vmatpush.msra.mxu0 %v1133
    %1157 = vmatpush.msra.mxu0 %v1132
    %1158 = vmatpush.msra.mxu0 %v1131
    %1159 = vmatpush.msra.mxu0 %v1130
    %1160 = vmatpush.msra.mxu0 %v1129
    %1161 = vmatmul.f32.gmra.mxu0 %v1126
    %v1162 = vpop.f32.mrf.mxu0
    %v1163 = vadd.f32 0.0, %v1162
    %1164 = vmatmul.f32.gmra.mxu0 %v1127
    %v1165 = vpop.f32.mrf.mxu0
    %v1166 = vadd.f32 0.0, %v1165
    %1167 = vdwg.mxu0
    %v1168 = vadd.f32 %v1011, %v1163
    %v1169 = vadd.f32 %v1012, %v1166
    %s1170 = scalar_lea.vmem %s16, 1
    %v1171 = vld [vmem:[%s1170] sm:$0x1]
    %v1173 = vperm.slane %v1171, 0
    %v1175 = vadd.f32 %v1168, %v1173
    %v1176 = vadd.f32 %v1169, %v1173
    %v1177 = vld [vmem:[%s17] sm:$0x1]
    %v1178 = vld [vmem:[%s18] sm:$0x1]
    %v1179 = vsel %vm120, %v1175, 0.0
    %1180 = vadd.xlane.f32.xlu0 %v1179
    %v1181 = vpop.xlane.xlu0 %1180
    %v1182 = vsel %vm120, %v1176, 0.0
    %1183 = vadd.xlane.f32.xlu0 %v1182
    %v1184 = vpop.xlane.xlu0 %1183
    %v1185 = vmul.f32 %v1181, %v133
    %v1186 = vmul.f32 %v1184, %v133
    %v1187 = vsub.f32 %v1175, %v1185
    %v1188 = vsub.f32 %v1176, %v1186
    %v1189 = vmul.f32 %v1187, %v1187
    %v1190 = vmul.f32 %v1188, %v1188
    %v1191 = vsel %vm120, %v1189, 0.0
    %1192 = vadd.xlane.f32.xlu0 %v1191
    %v1193 = vpop.xlane.xlu0 %1192
    %v1194 = vsel %vm120, %v1190, 0.0
    %1195 = vadd.xlane.f32.xlu0 %v1194
    %v1196 = vpop.xlane.xlu0 %1195
    %v1197 = vmul.f32 %v1193, %v133
    %v1198 = vmul.f32 %v1196, %v133
    %v1199 = vadd.f32 %v1197, 1e-05
    %v1200 = vadd.f32 %v1198, 1e-05
    %v1201 = vrsqrt.pop %v1199
    %v1202 = vmul.f32 %v1201, %v1199
    %v1203 = vmul.f32 %v1202, %v1201
    %v1204 = vmul.f32 0.5, %v1203
    %v1205 = vsub.f32 1.5, %v1204
    %v1206 = vmul.f32 %v1201, %v1205
    %vm1207 = vweird.f32 %v1199
    %vm1208 = vweird.f32 %v1201
    %vm1209 = vmor %vm1207, %vm1208
    %v1210 = vsel %vm1209, %v1201, %v1206
    %v1211 = vrsqrt.pop %v1200
    %v1212 = vmul.f32 %v1211, %v1200
    %v1213 = vmul.f32 %v1212, %v1211
    %v1214 = vmul.f32 0.5, %v1213
    %v1215 = vsub.f32 1.5, %v1214
    %v1216 = vmul.f32 %v1211, %v1215
    %vm1217 = vweird.f32 %v1200
    %vm1218 = vweird.f32 %v1211
    %vm1219 = vmor %vm1217, %vm1218
    %v1220 = vsel %vm1219, %v1211, %v1216
    %v1221 = vmul.f32 %v1187, %v1210
    %v1222 = vmul.f32 %v1188, %v1220
    %v1224 = vperm.slane %v1177, 0
    %v1226 = vmul.f32 %v1221, %v1224
    %v1227 = vmul.f32 %v1222, %v1224
    %v1229 = vperm.slane %v1178, 0
    %v1231 = vadd.f32 %v1226, %v1229
    %v1232 = vadd.f32 %v1227, %v1229
    %1233 = vst.msk [vmem:[#allocation2] sm:$0xff] %vm120, %v1231
    %1234 = vst.msk [vmem:[#allocation2 + $0x8] sm:$0xff] %vm120, %v1232
    %v1235 = vld [vmem:[%s19] sm:$0xff]
    %v1236 = vld [vmem:[%s19 + $0x8] sm:$0xff]
    %v1237 = vld [vmem:[%s19 + $0x10] sm:$0xff]
    %v1238 = vld [vmem:[%s19 + $0x18] sm:$0xff]
    %v1239 = vld [vmem:[%s20] sm:$0x1]
    %v1241 = vperm.slane %v1239, 0
    %v1244 = vsel %vm120, %v1231, 0
    %v1247 = vsel %vm120, %v1232, 0
    %1249 = vmatpush.msra.mxu0 0.0
    %1250 = vmatpush.msra.mxu0 0.0
    %1251 = vmatpush.msra.mxu0 0.0
    %1252 = vmatpush.msra.mxu0 0.0
    %1253 = vmatpush.msra.mxu0 0.0
    %1254 = vmatpush.msra.mxu0 0.0
    %1255 = vmatpush.msra.mxu0 0.0
    %1256 = vmatpush.msra.mxu0 0.0
    %1257 = vmatpush.msra.mxu0 0.0
    %1258 = vmatpush.msra.mxu0 0.0
    %1259 = vmatpush.msra.mxu0 0.0
    %1260 = vmatpush.msra.mxu0 0.0
    %1261 = vmatpush.msra.mxu0 %v1238
    %1262 = vmatpush.msra.mxu0 %v1237
    %1263 = vmatpush.msra.mxu0 %v1236
    %1264 = vmatpush.msra.mxu0 %v1235
    %1265 = vmatmul.f32.gmra.mxu0 %v1244
    %v1266 = vpop.f32.mrf.mxu0
    %v1267 = vadd.f32 %v1241, %v1266
    %1268 = vmatmul.f32.gmra.mxu0 %v1247
    %v1269 = vpop.f32.mrf.mxu0
    %v1270 = vadd.f32 %v1241, %v1269
    %1271 = vdwg.mxu0
    %1272 = vst [vmem:[%s22] sm:$0xff] %v1267
    %1273 = vst [vmem:[%s22 + $0x8] sm:$0xff] %v1270
    // Predicated region
    $region86: #{gpt2_multihead_forward.1} parent=1 // pred_check
      _
    $region87: #{gpt2_multihead_forward.1} parent=1 // pred_check_branch
      %1275 = sbr.rel (0) target = $region89
    $region88: #{gpt2_multihead_forward.1} parent=1 // pred_region
      %1277 = vsyncadd [#allocation3], 0
      %s1278 = sshll.u32 [#allocation2], 4
      %s1279 = int_to_ptr.vmem [resolvable:$true] %s1278
      %s1280 = sshll.u32 %s21, 4
      %s1281 = int_to_ptr.hbm [resolvable:$true] %s1280
      %1286 = dma.vmem_to_hbm [thread:$0]  %s1279, 256, %s1281, [#allocation3], 128, 128, 8
    $region89: #{gpt2_multihead_forward.1} parent=1 // pred_fallthru
      _
    // Predicated region
    $region90: #{gpt2_multihead_forward.1} parent=1 // pred_check
      _
    $region91: #{gpt2_multihead_forward.1} parent=1 // pred_check_branch
      %1288 = sbr.rel (0) target = $region93
    $region92: #{gpt2_multihead_forward.1} parent=1 // pred_region
      _
    $region93: #{gpt2_multihead_forward.1} parent=1 // pred_fallthru
      _
    // Predicated region
    $region94: #{gpt2_multihead_forward.1} parent=1 // pred_check
      _
    $region95: #{gpt2_multihead_forward.1} parent=1 // pred_check_branch
      %1290 = sbr.rel (0) target = $region97
    $region96: #{gpt2_multihead_forward.1} parent=1 // pred_region
      %1292 = dma.done [#allocation3], 256
    $region97: #{gpt2_multihead_forward.1} parent=1 // pred_fallthru
      _
    // Predicated region
    $region98: #{gpt2_multihead_forward.1} parent=1 // pred_check
      _
    $region99: #{gpt2_multihead_forward.1} parent=1 // pred_check_branch
      %1294 = sbr.rel (0) target = $region101
    $region100: #{gpt2_multihead_forward.1} parent=1 // pred_region
      _
    $region101: #{gpt2_multihead_forward.1} parent=1 // pred_fallthru
      _
    %1295 = vsyncpa [#allocation3], 1

</llo_original>
